<compile_context>
chip_gen: v5e
topology: v5e:2x2
jax: 0.10.0
libtpu: 0.0.40
codegen_flags: <defaults>
</compile_context>

<pallas_src>
import numpy as np
import jax
import jax.numpy as jnp
from jax.experimental import pallas as pl
from jax.experimental.pallas import tpu as pltpu


def _choose_token_tile(N, C, K):
    """Largest token tile (multiple of 128, MXU-friendly) fitting a ~12 MiB
    token-dependent VMEM budget (x + qout + residual slabs, dist/one-hot)."""
    budget = 12 * 1024 * 1024
    per_token = 3 * C * 4 + 2 * K * 4
    tn = max(128, min(4096, (budget // per_token) // 128 * 128))
    n_pad128 = ((N + 127) // 128) * 128
    tn = min(tn, n_pad128)
    if tn >= 256:
        tn = (tn // 256) * 256   # MXU tile alignment on v6e/v7x
    return tn


def residual_vq_forward(x, codebooks, *, tile_tokens=None, use_bf16_distance=False):
    """x: [B, C, T] f32; codebooks: [Q, K, C] f32.

    Returns (quantized_out [B,C,T], all_indices [B,T,Q] int32, commit_loss,
    perplexity), matching ResidualVQ.forward in eval mode (no quantize
    dropout, no codebook temperature)."""
    B, C, T = x.shape
    Q, K, Cc = codebooks.shape
    assert Cc == C
    N = B * T

    TN = tile_tokens if tile_tokens is not None else _choose_token_tile(N, C, K)
    N_pad = ((N + TN - 1) // TN) * TN
    n_tiles = N_pad // TN
    needs_mask = N_pad != N

    x_flat = jnp.transpose(x, (0, 2, 1)).reshape(N, C)
    if needs_mask:
        x_flat = jnp.pad(x_flat, ((0, N_pad - N), (0, 0)))

    # ||codebook||^2 hoisted out of the hot loop; [Q, 1, K] for lane-dense blocks.
    cb2 = jnp.sum(codebooks * codebooks, axis=-1).reshape(Q, 1, K)

    def kernel(x_ref, cb_ref, cb2_ref, qout_ref, idx_ref, cnt_ref, sqe_ref, res_ref):
        q = pl.program_id(1)

        @pl.when(q == 0)
        def _():
            res_ref[...] = x_ref[...]
            qout_ref[...] = jnp.zeros_like(qout_ref)

        r = res_ref[...]                  # [TN, C] current residual
        cb = cb_ref[0]                    # [K, C]  this level's codebook

        if use_bf16_distance:
            # ~3x MXU throughput; may flip near-tied argmins vs f32 reference.
            cross = jax.lax.dot_general(
                r.astype(jnp.bfloat16), cb.astype(jnp.bfloat16),
                dimension_numbers=(((1,), (1,)), ((), ())),
                preferred_element_type=jnp.float32)
        else:
            cross = jax.lax.dot_general(
                r, cb,
                dimension_numbers=(((1,), (1,)), ((), ())),
                preferred_element_type=jnp.float32)

        # argmin_k ||r - c_k||^2 == argmin_k (||c_k||^2 - 2 r.c_k)
        dist = cb2_ref[0] - 2.0 * cross                       # [TN, K]

        # first-occurrence argmin (matches torch.argmin tie-break)
        lane_iota = jax.lax.broadcasted_iota(jnp.int32, (TN, K), 1)
        min_d = jnp.min(dist, axis=-1, keepdims=True)
        masked_iota = jnp.where(dist <= min_d, lane_iota, K)
        idx2 = jnp.min(masked_iota, axis=-1, keepdims=True)   # [TN, 1]
        idx1 = jnp.min(masked_iota, axis=-1)                  # [TN]

        # dequantize via one-hot matmul (MXU) -> exact codebook rows
        onehot = (lane_iota == idx2).astype(jnp.float32)      # [TN, K]
        xd = jnp.dot(onehot, cb, preferred_element_type=jnp.float32)  # [TN, C]

        err = r - xd
        res_ref[...] = err                # residual -= quantized
        qout_ref[...] += xd               # quantized_out += quantized
        idx_ref[q, :] = idx1.astype(jnp.int32)   # lane-dense row store

        err_sq = err * err
        oh = onehot
        if needs_mask:                    # exclude padded tokens from the stats
            rows = (jax.lax.broadcasted_iota(jnp.int32, (TN, 1), 0)
                    + pl.program_id(0) * TN)
            valid = (rows < N).astype(jnp.float32)            # [TN, 1]
            err_sq = err_sq * valid
            oh = onehot * valid
        cnt_ref[0, q, :] = jnp.sum(oh, axis=0)                # [K] partial counts
        tile_sqe = jnp.sum(jnp.sum(err_sq, axis=1, keepdims=True), axis=0)  # [1]
        sqe_ref[0, q, :] = jnp.broadcast_to(tile_sqe, (128,))

    grid_spec = pltpu.PrefetchScalarGridSpec(
        num_scalar_prefetch=0,
        grid=(n_tiles, Q),                                    # level axis innermost
        in_specs=[
            pl.BlockSpec((TN, C), lambda n, q: (n, 0)),       # token tile
            pl.BlockSpec((1, K, C), lambda n, q: (q, 0, 0)),  # codebook, level q
            pl.BlockSpec((1, 1, K), lambda n, q: (q, 0, 0)),  # ||codebook||^2
        ],
        out_specs=[
            pl.BlockSpec((TN, C), lambda n, q: (n, 0)),       # quantized_out (acc)
            pl.BlockSpec((Q, TN), lambda n, q: (0, n)),       # indices (lane-dense)
            pl.BlockSpec((1, Q, K), lambda n, q: (n, 0, 0)),  # per-tile code counts
            pl.BlockSpec((1, Q, 128), lambda n, q: (n, 0, 0)),  # per-tile sq error
        ],
        scratch_shapes=[pltpu.VMEM((TN, C), jnp.float32)],    # carried residual
    )

    qout, idx, counts, sqerr = pl.pallas_call(
        kernel,
        out_shape=(
            jax.ShapeDtypeStruct((N_pad, C), jnp.float32),
            jax.ShapeDtypeStruct((Q, N_pad), jnp.int32),
            jax.ShapeDtypeStruct((n_tiles, Q, K), jnp.float32),
            jax.ShapeDtypeStruct((n_tiles, Q, 128), jnp.float32),
        ),
        grid_spec=grid_spec,
        compiler_params=pltpu.CompilerParams(
            dimension_semantics=("parallel", "arbitrary"),
            vmem_limit_bytes=48 * 1024 * 1024,
        ),
    )(x_flat, codebooks, cb2)

    # glue: strip padding, reshape to PyTorch conventions, finalize scalars.
    quantized_out = jnp.transpose(qout[:N].reshape(B, T, C), (0, 2, 1))   # [B,C,T]
    all_indices = jnp.transpose(idx[:, :N].reshape(Q, B, T), (1, 2, 0))   # [B,T,Q]
    counts = jnp.sum(counts, axis=0)                                      # [Q,K]
    losses = jnp.sum(sqerr[:, :, 0], axis=0) / (N * C)                    # [Q]
    loss = jnp.mean(losses)
    prob = counts / jnp.sum(counts, axis=-1, keepdims=True)
    perp = jnp.exp(-jnp.sum(prob * jnp.log(prob + 1e-7), axis=-1))
    perplexity = jnp.mean(perp)
    return quantized_out, all_indices, loss, perplexity


def residual_vq_reference(x, codebooks):
    """Pure-JAX reference mirroring the PyTorch forward (eval mode).  Uses the
    argmin-equivalent reduced distance ||c||^2 - 2 r.c (same codes as the full
    squared distance in exact arithmetic)."""
    B, C, T = x.shape
    Q, K, _ = codebooks.shape
    x_flat = jnp.transpose(x, (0, 2, 1)).reshape(B * T, C)
    residual = x_flat
    qout = jnp.zeros_like(x_flat)
    idxs, losses, perps = [], [], []
    for q in range(Q):
        cb = codebooks[q]
        dist = jnp.sum(cb ** 2, -1)[None, :] - 2.0 * (residual @ cb.T)
        idx = jnp.argmin(dist, axis=-1)
        xd = cb[idx]
        losses.append(jnp.mean((residual - xd) ** 2))
        cnt = jnp.sum(jax.nn.one_hot(idx, K, dtype=jnp.float32), axis=0)
        prob = cnt / cnt.sum()
        perps.append(jnp.exp(-jnp.sum(prob * jnp.log(prob + 1e-7))))
        residual = residual - xd
        qout = qout + xd
        idxs.append(idx.astype(jnp.int32))
    quantized_out = jnp.transpose(qout.reshape(B, T, C), (0, 2, 1))
    all_indices = jnp.stack([i.reshape(B, T) for i in idxs], axis=-1)
    return (quantized_out, all_indices,
            jnp.mean(jnp.stack(losses)), jnp.mean(jnp.stack(perps)))


if __name__ == "__main__":
    # small shapes consistent with the module's [B, code_dim, T] convention
    B, C, T = 2, 32, 16          # batch, code_dim, sequence length
    Q, K = 3, 128                # num_quantizers, nb_code (codebook size)

    key = jax.random.PRNGKey(0)
    kx, kc = jax.random.split(key)
    x = jax.random.normal(kx, (B, C, T), dtype=jnp.float32)
    codebooks = 0.5 * jax.random.normal(kc, (Q, K, C), dtype=jnp.float32)

    out = residual_vq_forward(x, codebooks)
    out = jax.block_until_ready(out)

    ref = residual_vq_reference(x, codebooks)
    np.testing.assert_allclose(np.asarray(out[0]), np.asarray(ref[0]),
                               rtol=1e-5, atol=1e-5)
    assert np.array_equal(np.asarray(out[1]), np.asarray(ref[1]))
    np.testing.assert_allclose(float(out[2]), float(ref[2]), rtol=1e-5, atol=1e-6)
    np.testing.assert_allclose(float(out[3]), float(ref[3]), rtol=1e-5, atol=1e-5)

    print("KERNEL_OK")
</pallas_src>

<mosaic_0001>
module attributes {stable_mosaic.version = 11 : i64} {
  func.func @kernel(%arg0: i32, %arg1: i32, %arg2: memref<128x32xf32, #tpu.memory_space<vmem>>, %arg3: memref<1x128x32xf32, #tpu.memory_space<vmem>>, %arg4: memref<1x1x128xf32, #tpu.memory_space<vmem>>, %arg5: memref<128x32xf32, #tpu.memory_space<vmem>>, %arg6: memref<3x128xi32, #tpu.memory_space<vmem>>, %arg7: memref<1x3x128xf32, #tpu.memory_space<vmem>>, %arg8: memref<1x3x128xf32, #tpu.memory_space<vmem>>, %arg9: memref<128x32xf32, #tpu.memory_space<vmem>>) attributes {dimension_semantics = [#tpu.dimension_semantics<parallel>, #tpu.dimension_semantics<arbitrary>], iteration_bounds = array<i64: 1, 3>, scalar_prefetch = 0 : i64, scratch_operands = 1 : i64, tpu.core_type = #tpu.core_type<tc>, window_params = [{transform_indices = @transform_0, window_bounds = array<i64: 128, 32>}, {transform_indices = @transform_1, window_bounds = array<i64: 1, 128, 32>}, {transform_indices = @transform_2, window_bounds = array<i64: 1, 1, 128>}, {transform_indices = @transform_3, window_bounds = array<i64: 128, 32>}, {transform_indices = @transform_4, window_bounds = array<i64: 3, 128>}, {transform_indices = @transform_5, window_bounds = array<i64: 1, 3, 128>}, {transform_indices = @transform_6, window_bounds = array<i64: 1, 3, 128>}]} {
    %c0_i32 = arith.constant 0 : i32
    %0 = arith.cmpi eq, %arg1, %c0_i32 : i32
    %1 = arith.extui %0 : i1 to i32
    %c0_i32_0 = arith.constant 0 : i32
    %2 = arith.cmpi ne, %1, %c0_i32_0 : i32
    scf.if %2 {
      %c0_28 = arith.constant 0 : index
      %c0_29 = arith.constant 0 : index
      %64 = vector.load %arg2[%c0_28, %c0_29] : memref<128x32xf32, #tpu.memory_space<vmem>>, vector<128x32xf32>
      %c0_30 = arith.constant 0 : index
      %c0_31 = arith.constant 0 : index
      %65 = vector.load %arg9[%c0_30, %c0_31] : memref<128x32xf32, #tpu.memory_space<vmem>>, vector<128x32xf32>
      tpu.vector_store %arg9[%c0_30, %c0_31], %64 {strides = array<i32>} : memref<128x32xf32, #tpu.memory_space<vmem>>, vector<128x32xf32>,
      %cst_32 = arith.constant 0.000000e+00 : f32
      %66 = vector.broadcast %cst_32 : f32 to vector<128x32xf32>
      %c0_33 = arith.constant 0 : index
      %c0_34 = arith.constant 0 : index
      %67 = vector.load %arg5[%c0_33, %c0_34] : memref<128x32xf32, #tpu.memory_space<vmem>>, vector<128x32xf32>
      tpu.vector_store %arg5[%c0_33, %c0_34], %66 {strides = array<i32>} : memref<128x32xf32, #tpu.memory_space<vmem>>, vector<128x32xf32>,
    } else {
    }
    %c0 = arith.constant 0 : index
    %c0_1 = arith.constant 0 : index
    %3 = vector.load %arg9[%c0, %c0_1] : memref<128x32xf32, #tpu.memory_space<vmem>>, vector<128x32xf32>
    %c0_2 = arith.constant 0 : index
    %c0_3 = arith.constant 0 : index
    %c0_4 = arith.constant 0 : index
    %4 = vector.load %arg3[%c0_2, %c0_3, %c0_4] : memref<1x128x32xf32, #tpu.memory_space<vmem>>, vector<1x128x32xf32>
    %5 = vector.shape_cast %4 : vector<1x128x32xf32> to vector<128x32xf32>
    %cst = arith.constant dense<0.000000e+00> : vector<128x128xf32>
    %6 = tpu.matmul %3, %5, %cst {dimension_numbers = #tpu.dot_dimension_numbers<[1], [1], [0], [0], [0, 0, 1, 0], [], []>} : vector<128x32xf32>, vector<128x32xf32>, vector<128x128xf32> -> vector<128x128xf32>
    %c0_5 = arith.constant 0 : index
    %c0_6 = arith.constant 0 : index
    %c0_7 = arith.constant 0 : index
    %7 = vector.load %arg4[%c0_5, %c0_6, %c0_7] : memref<1x1x128xf32, #tpu.memory_space<vmem>>, vector<1x1x128xf32>
    %8 = vector.shape_cast %7 : vector<1x1x128xf32> to vector<1x128xf32>
    %cst_8 = arith.constant 2.000000e+00 : f32
    %9 = vector.broadcast %cst_8 : f32 to vector<128x128xf32>
    %10 = arith.mulf %9, %6 : vector<128x128xf32>
    %11 = vector.broadcast %8 : vector<1x128xf32> to vector<128x128xf32>
    %12 = arith.subf %11, %10 : vector<128x128xf32>
    %13 = tpu.iota {dimensions = array<i32: 1>} : vector<128x128xi32>
    %cst_9 = arith.constant dense<0x7F800000> : vector<128xf32>
    %14 = vector.multi_reduction <minimumf>, %12, %cst_9 [1] : vector<128x128xf32> to vector<128xf32>
    %15 = vector.shape_cast %14 : vector<128xf32> to vector<128x1xf32>
    %16 = vector.broadcast %15 : vector<128x1xf32> to vector<128x128xf32>
    %17 = arith.cmpf ole, %12, %16 : vector<128x128xf32>
    %c128_i32 = arith.constant 128 : i32
    %18 = vector.broadcast %c128_i32 : i32 to vector<128x128xi32>
    %19 = arith.select %17, %13, %18 : vector<128x128xi1>, vector<128x128xi32>
    %cst_10 = arith.constant dense<2147483647> : vector<128xi32>
    %20 = vector.multi_reduction <minsi>, %19, %cst_10 [1] : vector<128x128xi32> to vector<128xi32>
    %21 = vector.shape_cast %20 : vector<128xi32> to vector<128x1xi32>
    %cst_11 = arith.constant dense<2147483647> : vector<128xi32>
    %22 = vector.multi_reduction <minsi>, %19, %cst_11 [1] : vector<128x128xi32> to vector<128xi32>
    %23 = vector.broadcast %21 : vector<128x1xi32> to vector<128x128xi32>
    %24 = arith.cmpi eq, %13, %23 : vector<128x128xi32>
    %25 = arith.extui %24 : vector<128x128xi1> to vector<128x128xi32>
    %26 = arith.sitofp %25 : vector<128x128xi32> to vector<128x128xf32>
    %cst_12 = arith.constant dense<0.000000e+00> : vector<128x32xf32>
    %27 = tpu.matmul %26, %5, %cst_12 {dimension_numbers = #tpu.dot_dimension_numbers<[1], [0], [0], [1], [0, 0, 1, 1], [], []>} : vector<128x128xf32>, vector<128x32xf32>, vector<128x32xf32> -> vector<128x32xf32>
    %28 = arith.subf %3, %27 : vector<128x32xf32>
    %c0_13 = arith.constant 0 : index
    %c0_14 = arith.constant 0 : index
    %29 = vector.load %arg9[%c0_13, %c0_14] : memref<128x32xf32, #tpu.memory_space<vmem>>, vector<128x32xf32>
    tpu.vector_store %arg9[%c0_13, %c0_14], %28 {strides = array<i32>} : memref<128x32xf32, #tpu.memory_space<vmem>>, vector<128x32xf32>,
    %c0_15 = arith.constant 0 : index
    %c0_16 = arith.constant 0 : index
    %30 = vector.load %arg5[%c0_15, %c0_16] : memref<128x32xf32, #tpu.memory_space<vmem>>, vector<128x32xf32>
    %31 = arith.addf %30, %27 : vector<128x32xf32>
    %c0_17 = arith.constant 0 : index
    %c0_18 = arith.constant 0 : index
    %32 = vector.load %arg5[%c0_17, %c0_18] : memref<128x32xf32, #tpu.memory_space<vmem>>, vector<128x32xf32>
    tpu.vector_store %arg5[%c0_17, %c0_18], %31 {strides = array<i32>} : memref<128x32xf32, #tpu.memory_space<vmem>>, vector<128x32xf32>,
    %33 = arith.index_cast %arg1 : i32 to index
    %c0_19 = arith.constant 0 : index
    %34 = vector.load %arg6[%33, %c0_19] : memref<3x128xi32, #tpu.memory_space<vmem>>, vector<1x128xi32>
    %35 = vector.shape_cast %34 : vector<1x128xi32> to vector<128xi32>
    %36 = vector.shape_cast %22 : vector<128xi32> to vector<1x128xi32>
    tpu.vector_store %arg6[%33, %c0_19], %36 {strides = array<i32>} : memref<3x128xi32, #tpu.memory_space<vmem>>, vector<1x128xi32>,
    %37 = arith.mulf %28, %28 : vector<128x32xf32>
    %38 = tpu.iota {dimensions = array<i32: 0>} : vector<128x1xi32>
    %c128_i32_20 = arith.constant 128 : i32
    %39 = arith.muli %arg0, %c128_i32_20 : i32
    %40 = vector.broadcast %39 : i32 to vector<128x1xi32>
    %41 = arith.addi %38, %40 : vector<128x1xi32>
    %c32_i32 = arith.constant 32 : i32
    %42 = vector.broadcast %c32_i32 : i32 to vector<128x1xi32>
    %43 = arith.cmpi slt, %41, %42 : vector<128x1xi32>
    %44 = arith.extui %43 : vector<128x1xi1> to vector<128x1xi32>
    %45 = arith.sitofp %44 : vector<128x1xi32> to vector<128x1xf32>
    %46 = vector.broadcast %45 : vector<128x1xf32> to vector<128x32xf32>
    %47 = arith.mulf %37, %46 : vector<128x32xf32>
    %48 = vector.broadcast %45 : vector<128x1xf32> to vector<128x128xf32>
    %49 = arith.mulf %26, %48 : vector<128x128xf32>
    %cst_21 = arith.constant dense<0.000000e+00> : vector<128xf32>
    %50 = vector.multi_reduction <add>, %49, %cst_21 [0] : vector<128x128xf32> to vector<128xf32>
    %c0_22 = arith.constant 0 : index
    %51 = arith.index_cast %arg1 : i32 to index
    %c0_23 = arith.constant 0 : index
    %52 = vector.load %arg7[%c0_22, %51, %c0_23] : memref<1x3x128xf32, #tpu.memory_space<vmem>>, vector<1x1x128xf32>
    %53 = vector.shape_cast %52 : vector<1x1x128xf32> to vector<128xf32>
    %54 = vector.shape_cast %50 : vector<128xf32> to vector<1x1x128xf32>
    tpu.vector_store %arg7[%c0_22, %51, %c0_23], %54 {strides = array<i32>} : memref<1x3x128xf32, #tpu.memory_space<vmem>>, vector<1x1x128xf32>,
    %cst_24 = arith.constant dense<0.000000e+00> : vector<128xf32>
    %55 = vector.multi_reduction <add>, %47, %cst_24 [1] : vector<128x32xf32> to vector<128xf32>
    %56 = vector.shape_cast %55 : vector<128xf32> to vector<128x1xf32>
    %cst_25 = arith.constant dense<0.000000e+00> : vector<1xf32>
    %57 = vector.multi_reduction <add>, %56, %cst_25 [0] : vector<128x1xf32> to vector<1xf32>
    %58 = vector.shape_cast %57 : vector<1xf32> to vector<1xf32>
    %59 = vector.broadcast %58 : vector<1xf32> to vector<128xf32>
    %c0_26 = arith.constant 0 : index
    %60 = arith.index_cast %arg1 : i32 to index
    %c0_27 = arith.constant 0 : index
    %61 = vector.load %arg8[%c0_26, %60, %c0_27] : memref<1x3x128xf32, #tpu.memory_space<vmem>>, vector<1x1x128xf32>
    %62 = vector.shape_cast %61 : vector<1x1x128xf32> to vector<128xf32>
    %63 = vector.shape_cast %59 : vector<128xf32> to vector<1x1x128xf32>
    tpu.vector_store %arg8[%c0_26, %60, %c0_27], %63 {strides = array<i32>} : memref<1x3x128xf32, #tpu.memory_space<vmem>>, vector<1x1x128xf32>,
    return
  }
  func.func @transform_0(%arg0: i32, %arg1: i32) -> (i32, i32) {
    %c0_i32 = arith.constant 0 : i32
    %c0_i32_0 = arith.constant 0 : i32
    return %arg0, %c0_i32 : i32, i32
  }
  func.func @transform_1(%arg0: i32, %arg1: i32) -> (i32, i32, i32) {
    %c0_i32 = arith.constant 0 : i32
    %c0_i32_0 = arith.constant 0 : i32
    %c0_i32_1 = arith.constant 0 : i32
    return %arg1, %c0_i32, %c0_i32_0 : i32, i32, i32
  }
  func.func @transform_2(%arg0: i32, %arg1: i32) -> (i32, i32, i32) {
    %c0_i32 = arith.constant 0 : i32
    %c0_i32_0 = arith.constant 0 : i32
    %c0_i32_1 = arith.constant 0 : i32
    return %arg1, %c0_i32, %c0_i32_0 : i32, i32, i32
  }
  func.func @transform_3(%arg0: i32, %arg1: i32) -> (i32, i32) {
    %c0_i32 = arith.constant 0 : i32
    %c0_i32_0 = arith.constant 0 : i32
    return %arg0, %c0_i32 : i32, i32
  }
  func.func @transform_4(%arg0: i32, %arg1: i32) -> (i32, i32) {
    %c0_i32 = arith.constant 0 : i32
    %c0_i32_0 = arith.constant 0 : i32
    return %c0_i32, %arg0 : i32, i32
  }
  func.func @transform_5(%arg0: i32, %arg1: i32) -> (i32, i32, i32) {
    %c0_i32 = arith.constant 0 : i32
    %c0_i32_0 = arith.constant 0 : i32
    %c0_i32_1 = arith.constant 0 : i32
    return %arg0, %c0_i32, %c0_i32_0 : i32, i32, i32
  }
  func.func @transform_6(%arg0: i32, %arg1: i32) -> (i32, i32, i32) {
    %c0_i32 = arith.constant 0 : i32
    %c0_i32_0 = arith.constant 0 : i32
    %c0_i32_1 = arith.constant 0 : i32
    return %arg0, %c0_i32, %c0_i32_0 : i32, i32, i32
  }
}

</mosaic_0001>

<llo_original>
// kernel: tpu_custom_call.1
$region0: #{tpu_custom_call.1}
  #allocation0 [shape = 'u32[]', space=smem, size = 0x4, offset = 0x4, fixed_abs, tag = 'smem constant byte address 0x4 - core index']
  #allocation1 [shape = 'u32[72,128]{1,0:T(1,128)}', space=vmem, size = 0x9000, scoped, tag = 'internal scratch']
  #allocation2 [shape = 'f32[128,32]{1,0:T(8,128)}', space=vmem, size = 0x10000, scoped, tag = 'scratch operand']
  %s0 = inlined_call_operand.vmem [shape: f32[128,32], index: 0, kind: input, shape index: {}]
  %s1 = inlined_call_operand.vmem [shape: f32[3,128,32], index: 1, kind: input, shape index: {}]
  %s2 = inlined_call_operand.vmem [shape: f32[3,1,128], index: 2, kind: input, shape index: {}]
  %s3 = inlined_call_operand.vmem [shape: f32[128,32], index: 3, kind: output, shape index: {0}]
  %s4 = inlined_call_operand.hbm [shape: s32[3,128], index: 4, kind: output, shape index: {1}]
  %s5 = inlined_call_operand.vmem [shape: f32[1,3,128], index: 5, kind: output, shape index: {2}]
  %s6 = inlined_call_operand.vmem [shape: f32[1,3,128], index: 6, kind: output, shape index: {3}]
  %7 = xla_tuple %s3, %s4, %s5, %s6
  %s8 = sld [smem:[#allocation0]]
  $region73: #{tpu_custom_call.1} parent=0
    _
  %s10 = ssub.s32 1, %s8
  %s11 = scalar_select 0, %s10, %s8
  $region1: #{tpu_custom_call.1} parent=0
    #allocation3 [shape = 'u8[2048]{0}', space=vmem, size = 0x800, scoped, tag = 'output window, operand 1, single buffered']
    #allocation4 [shape = 's32[2]{0}', space=sflag, size = 0x8, scoped, tag = 'scoped memory for tpu_custom_call.1']
    %12 = vsyncpa [#allocation4], 0
    loop: start=0, step=1, limit=5
    $region2: #{tpu_custom_call.1} parent=1 // loop_pre_header
      _
    $region3: #{tpu_custom_call.1} parent=1 // loop_header
      %s14 = sphi 0, %s18
      %p15 = scmp.ge.s32.totalorder %s14, 5
      %s21 = sphi 0, %s33
      %s22 = sphi 0, %s29
      %s23 = sphi 0, %s21
      %s24 = sphi 0, %s22
      %s25 = sphi 0, %s23
      %s26 = sphi 0, %s24
      %s36 = sphi 0, %s38
      %s39 = sphi 0, %s36
      %s40 = sphi 0, %s39
      %s56 = sphi 0, %s40
      %s62 = sphi 0, %s64
      %s65 = sphi 0, %s62
      %s66 = sphi 0, %s65
      %s82 = sphi 0, %s66
      %s88 = sphi 0, %s90
      %s91 = sphi 0, %s88
      %s92 = sphi 0, %s91
      %s108 = sphi 0, %s92
      %s114 = sphi 0, %s116
      %s117 = sphi 0, %s114
      %s118 = sphi 0, %s117
      %s134 = sphi 0, %s118
      %s140 = sphi 0, %s142
      %s143 = sphi 0, %s140
      %s144 = sphi 0, %s143
      %s160 = sphi 0, %s144
      %s166 = sphi 0, %s168
      %s169 = sphi 0, %s166
      %s170 = sphi 0, %s169
      %s186 = sphi 0, %s170
      %s192 = sphi 0, %s194
      %s195 = sphi 0, %s192
      %s196 = sphi 0, %s195
      %s212 = sphi 0, %s196
    $region4: #{tpu_custom_call.1} parent=1 // loop_header_branch
      %17 = sbr.rel (%p15) target = $region8
    $region5: #{tpu_custom_call.1} parent=1 // loop_body
      %s19 = ssub.s32 %s14, 1
      %s20 = ssub.s32 %s14, 2
      %s27 = sadd.s32 1, %s22
      %p28 = scmp.ge.s32.totalorder %s27, 3
      %s29 = scalar_select %p28, 0, %s27
      %s30 = sadd.s32 1, %s21
      %s31 = scalar_select %p28, %s30, %s21
      %p32 = scmp.ge.s32.totalorder %s31, 1
      %s33 = scalar_select %p32, 0, %s31
      %s34 = ssub.s32 %s21, %s33
      %p35 = scmp.eq.s32.totalorder %s34, 0
      %s37 = sadd.s32 %s36, 1
      %s38 = scalar_select %p35, %s36, %s37
      %p41 = pneg %p35
      %p42 = scmp.eq.s32.totalorder %s14, 2
      %p43 = por %p41, %p42
      %p44 = scmp.ne.s32.totalorder %s36, %s39
      %p45 = scmp.eq.s32.totalorder %s14, 0
      %p46 = por %p44, %p45
      %p47 = scmp.ne.s32.totalorder %s36, %s39
      %p48 = scmp.eq.s32.totalorder %s19, 2
      %p49 = por %p47, %p48
      %p50 = scmp.ne.s32.totalorder %s39, %s40
      %p51 = scmp.eq.s32.totalorder %s19, 0
      %p52 = por %p50, %p51
      %p53 = scmp.ne.s32.totalorder %s39, %s40
      %p54 = scmp.eq.s32.totalorder %s20, 2
      %p55 = por %p53, %p54
      %p57 = scmp.ne.s32.totalorder %s40, %s56
      %p58 = scmp.eq.s32.totalorder %s20, 0
      %p59 = por %p57, %p58
      %s60 = ssub.s32 %s22, %s29
      %p61 = scmp.eq.s32.totalorder %s60, 0
      %s63 = sadd.s32 %s62, 1
      %s64 = scalar_select %p61, %s62, %s63
      %p67 = pneg %p61
      %p68 = scmp.eq.s32.totalorder %s14, 2
      %p69 = por %p67, %p68
      %p70 = scmp.ne.s32.totalorder %s62, %s65
      %p71 = scmp.eq.s32.totalorder %s14, 0
      %p72 = por %p70, %p71
      %p73 = scmp.ne.s32.totalorder %s62, %s65
      %p74 = scmp.eq.s32.totalorder %s19, 2
      %p75 = por %p73, %p74
      %p76 = scmp.ne.s32.totalorder %s65, %s66
      %p77 = scmp.eq.s32.totalorder %s19, 0
      %p78 = por %p76, %p77
      %p79 = scmp.ne.s32.totalorder %s65, %s66
      %p80 = scmp.eq.s32.totalorder %s20, 2
      %p81 = por %p79, %p80
      %p83 = scmp.ne.s32.totalorder %s66, %s82
      %p84 = scmp.eq.s32.totalorder %s20, 0
      %p85 = por %p83, %p84
      %s86 = ssub.s32 %s22, %s29
      %p87 = scmp.eq.s32.totalorder %s86, 0
      %s89 = sadd.s32 %s88, 1
      %s90 = scalar_select %p87, %s88, %s89
      %p93 = pneg %p87
      %p94 = scmp.eq.s32.totalorder %s14, 2
      %p95 = por %p93, %p94
      %p96 = scmp.ne.s32.totalorder %s88, %s91
      %p97 = scmp.eq.s32.totalorder %s14, 0
      %p98 = por %p96, %p97
      %p99 = scmp.ne.s32.totalorder %s88, %s91
      %p100 = scmp.eq.s32.totalorder %s19, 2
      %p101 = por %p99, %p100
      %p102 = scmp.ne.s32.totalorder %s91, %s92
      %p103 = scmp.eq.s32.totalorder %s19, 0
      %p104 = por %p102, %p103
      %p105 = scmp.ne.s32.totalorder %s91, %s92
      %p106 = scmp.eq.s32.totalorder %s20, 2
      %p107 = por %p105, %p106
      %p109 = scmp.ne.s32.totalorder %s92, %s108
      %p110 = scmp.eq.s32.totalorder %s20, 0
      %p111 = por %p109, %p110
      %s112 = ssub.s32 %s21, %s33
      %p113 = scmp.eq.s32.totalorder %s112, 0
      %s115 = sadd.s32 %s114, 1
      %s116 = scalar_select %p113, %s114, %s115
      %p119 = pneg %p113
      %p120 = scmp.eq.s32.totalorder %s14, 2
      %p121 = por %p119, %p120
      %p122 = scmp.ne.s32.totalorder %s114, %s117
      %p123 = scmp.eq.s32.totalorder %s14, 0
      %p124 = por %p122, %p123
      %p125 = scmp.ne.s32.totalorder %s114, %s117
      %p126 = scmp.eq.s32.totalorder %s19, 2
      %p127 = por %p125, %p126
      %p128 = scmp.ne.s32.totalorder %s117, %s118
      %p129 = scmp.eq.s32.totalorder %s19, 0
      %p130 = por %p128, %p129
      %p131 = scmp.ne.s32.totalorder %s117, %s118
      %p132 = scmp.eq.s32.totalorder %s20, 2
      %p133 = por %p131, %p132
      %p135 = scmp.ne.s32.totalorder %s118, %s134
      %p136 = scmp.eq.s32.totalorder %s20, 0
      %p137 = por %p135, %p136
      %s138 = ssub.s32 %s21, %s33
      %p139 = scmp.eq.s32.totalorder %s138, 0
      %s141 = sadd.s32 %s140, 1
      %s142 = scalar_select %p139, %s140, %s141
      %p145 = pneg %p139
      %p146 = scmp.eq.s32.totalorder %s14, 2
      %p147 = por %p145, %p146
      %p148 = scmp.ne.s32.totalorder %s140, %s143
      %p149 = scmp.eq.s32.totalorder %s14, 0
      %p150 = por %p148, %p149
      %p151 = scmp.ne.s32.totalorder %s140, %s143
      %p152 = scmp.eq.s32.totalorder %s19, 2
      %p153 = por %p151, %p152
      %p154 = scmp.ne.s32.totalorder %s143, %s144
      %p155 = scmp.eq.s32.totalorder %s19, 0
      %p156 = por %p154, %p155
      %p157 = scmp.ne.s32.totalorder %s143, %s144
      %p158 = scmp.eq.s32.totalorder %s20, 2
      %p159 = por %p157, %p158
      %p161 = scmp.ne.s32.totalorder %s144, %s160
      %p162 = scmp.eq.s32.totalorder %s20, 0
      %p163 = por %p161, %p162
      %s164 = ssub.s32 %s21, %s33
      %p165 = scmp.eq.s32.totalorder %s164, 0
      %s167 = sadd.s32 %s166, 1
      %s168 = scalar_select %p165, %s166, %s167
      %p171 = pneg %p165
      %p172 = scmp.eq.s32.totalorder %s14, 2
      %p173 = por %p171, %p172
      %p174 = scmp.ne.s32.totalorder %s166, %s169
      %p175 = scmp.eq.s32.totalorder %s14, 0
      %p176 = por %p174, %p175
      %p177 = scmp.ne.s32.totalorder %s166, %s169
      %p178 = scmp.eq.s32.totalorder %s19, 2
      %p179 = por %p177, %p178
      %p180 = scmp.ne.s32.totalorder %s169, %s170
      %p181 = scmp.eq.s32.totalorder %s19, 0
      %p182 = por %p180, %p181
      %p183 = scmp.ne.s32.totalorder %s169, %s170
      %p184 = scmp.eq.s32.totalorder %s20, 2
      %p185 = por %p183, %p184
      %p187 = scmp.ne.s32.totalorder %s170, %s186
      %p188 = scmp.eq.s32.totalorder %s20, 0
      %p189 = por %p187, %p188
      %s190 = ssub.s32 %s21, %s33
      %p191 = scmp.eq.s32.totalorder %s190, 0
      %s193 = sadd.s32 %s192, 1
      %s194 = scalar_select %p191, %s192, %s193
      %p197 = pneg %p191
      %p198 = scmp.eq.s32.totalorder %s14, 2
      %p199 = por %p197, %p198
      %p200 = scmp.ne.s32.totalorder %s192, %s195
      %p201 = scmp.eq.s32.totalorder %s14, 0
      %p202 = por %p200, %p201
      %p203 = scmp.ne.s32.totalorder %s192, %s195
      %p204 = scmp.eq.s32.totalorder %s19, 2
      %p205 = por %p203, %p204
      %p206 = scmp.ne.s32.totalorder %s195, %s196
      %p207 = scmp.eq.s32.totalorder %s19, 0
      %p208 = por %p206, %p207
      %p209 = scmp.ne.s32.totalorder %s195, %s196
      %p210 = scmp.eq.s32.totalorder %s20, 2
      %p211 = por %p209, %p210
      %p213 = scmp.ne.s32.totalorder %s196, %s212
      %p214 = scmp.eq.s32.totalorder %s20, 0
      %p215 = por %p213, %p214
      %p216 = scmp.le.s32.totalorder 1, %s14
      %p217 = scmp.lt.s32.totalorder %s14, 4
      %p218 = pnand %p216, %p217
      %p219 = pneg %p218
      // Predicated region
      $region9: #{tpu_custom_call.1} parent=5 // pred_check
        _
      $region10: #{tpu_custom_call.1} parent=5 // pred_check_branch
        %221 = sbr.rel (%p218) target = $region12
      $region11: #{tpu_custom_call.1} parent=5 // pred_region
        %s222 = ssub.s32 %s14, 1
        // Predicated region
        $region13: #{tpu_custom_call.1} parent=11 // pred_check
          %p223 = pneg %p52
        $region14: #{tpu_custom_call.1} parent=11 // pred_check_branch
          %225 = sbr.rel (%p223) target = $region16
        $region15: #{tpu_custom_call.1} parent=11 // pred_region
          %s226 = smul.u32 16, %s23
          %p227 = scmp.lt.s32.totalorder %s226, 15
          %s228 = scalar_select %p227, %s226, 15
          %s229 = smul.addr %s228, 8
          %s230 = scalar_lea.vmem %s0, %s229
          %s231 = smul.u32 16, %s23
        $region16: #{tpu_custom_call.1} parent=11 // pred_fallthru
          _
      $region12: #{tpu_custom_call.1} parent=5 // pred_fallthru
        _
      %p232 = scmp.lt.s32.totalorder %s14, 3
      // Predicated region
      $region17: #{tpu_custom_call.1} parent=5 // pred_check
        %p233 = pneg %p232
      $region18: #{tpu_custom_call.1} parent=5 // pred_check_branch
        %235 = sbr.rel (%p233) target = $region20
      $region19: #{tpu_custom_call.1} parent=5 // pred_region
        // Predicated region
        $region21: #{tpu_custom_call.1} parent=19 // pred_check
          %p236 = pneg %p72
        $region22: #{tpu_custom_call.1} parent=19 // pred_check_branch
          %238 = sbr.rel (%p236) target = $region24
        $region23: #{tpu_custom_call.1} parent=19 // pred_region
          %p239 = scmp.lt.s32.totalorder %s22, 2
          %s240 = scalar_select %p239, %s22, 2
          %s241 = smul.addr %s240, 16
          %s242 = smul.addr %s241, 8
          %s243 = scalar_lea.vmem %s1, %s242
        $region24: #{tpu_custom_call.1} parent=19 // pred_fallthru
          _
        // Predicated region
        $region25: #{tpu_custom_call.1} parent=19 // pred_check
          %p244 = pneg %p98
        $region26: #{tpu_custom_call.1} parent=19 // pred_check_branch
          %246 = sbr.rel (%p244) target = $region28
        $region27: #{tpu_custom_call.1} parent=19 // pred_region
          %p247 = scmp.lt.s32.totalorder %s22, 2
          %s248 = scalar_select %p247, %s22, 2
          %s249 = scalar_lea.vmem %s2, %s248
        $region28: #{tpu_custom_call.1} parent=19 // pred_fallthru
          _
      $region20: #{tpu_custom_call.1} parent=5 // pred_fallthru
        _
      %p250 = scmp.le.s32.totalorder 1, %s14
      %p251 = scmp.lt.s32.totalorder %s14, 4
      %p252 = pnand %p250, %p251
      %p253 = pneg %p252
      // Predicated region
      $region29: #{tpu_custom_call.1} parent=5 // pred_check
        _
      $region30: #{tpu_custom_call.1} parent=5 // pred_check_branch
        %255 = sbr.rel (%p252) target = $region32
      $region31: #{tpu_custom_call.1} parent=5 // pred_region
        %s256 = ssub.s32 %s14, 1
        %s257 = smul.u32 16, %s23
        %p258 = scmp.lt.s32.totalorder %s257, 15
        %s259 = scalar_select %p258, %s257, 15
        %s260 = smul.addr %s259, 8
        %s261 = scalar_lea.vmem %s0, %s260
        %p262 = pneg %p52
        %p263 = pneg %p49
        %p264 = scmp.lt.s32.totalorder %s24, 2
        %s265 = scalar_select %p264, %s24, 2
        %s266 = smul.addr %s265, 16
        %s267 = smul.addr %s266, 8
        %s268 = scalar_lea.vmem %s1, %s267
        %p269 = pneg %p78
        %p270 = pneg %p75
        %p271 = scmp.lt.s32.totalorder %s24, 2
        %s272 = scalar_select %p271, %s24, 2
        %s273 = scalar_lea.vmem %s2, %s272
        %p274 = pneg %p104
        %p275 = pneg %p101
        %p276 = pneg %p130
        %p277 = pneg %p127
        %s278 = smul.u32 16, %s23
        %p279 = scmp.lt.s32.totalorder %s278, 15
        %s280 = scalar_select %p279, %s278, 15
        %s281 = smul.addr %s280, 8
        %s282 = scalar_lea.vmem %s3, %s281
        %p283 = pneg %p156
        %p284 = pneg %p153
        %p285 = pneg %p182
        %p286 = pneg %p179
        %p287 = scmp.lt.s32.totalorder %s23, 0
        %s288 = scalar_select %p287, %s23, 0
        %s289 = smul.addr %s288, 4
        %s290 = scalar_lea.vmem %s5, %s289
        %p291 = pneg %p208
        %p292 = pneg %p205
        %p293 = scmp.lt.s32.totalorder %s23, 0
        %s294 = scalar_select %p293, %s23, 0
        %s295 = smul.addr %s294, 4
        %s296 = scalar_lea.vmem %s6, %s295
        %s297 = smul.u32 16, %s23
        %p298 = scmp.lt.s32.totalorder %s297, 15
        %s299 = scalar_select %p298, %s297, 15
        %s300 = smul.addr %s299, 8
        %s301 = scalar_lea.vmem %s0, %s300
        %s302 = smul.u32 16, %s23
        %p303 = scmp.lt.s32.totalorder %s24, 2
        %s304 = scalar_select %p303, %s24, 2
        %s305 = smul.addr %s304, 16
        %s306 = smul.addr %s305, 8
        %s307 = scalar_lea.vmem %s1, %s306
        %p308 = scmp.lt.s32.totalorder %s24, 2
        %s309 = scalar_select %p308, %s24, 2
        %s310 = scalar_lea.vmem %s2, %s309
        %s311 = smul.u32 16, %s23
        %p312 = scmp.lt.s32.totalorder %s311, 15
        %s313 = scalar_select %p312, %s311, 15
        %s314 = smul.addr %s313, 8
        %s315 = scalar_lea.vmem %s3, %s314
        %s316 = smul.u32 16, %s23
        %p317 = scmp.lt.s32.totalorder %s23, 0
        %s318 = scalar_select %p317, %s23, 0
        %s319 = smul.addr %s318, 4
        %s320 = scalar_lea.vmem %s5, %s319
        %p321 = scmp.lt.s32.totalorder %s23, 0
        %s322 = scalar_select %p321, %s23, 0
        %s323 = smul.addr %s322, 4
        %s324 = scalar_lea.vmem %s6, %s323
        %p325 = scmp.eq.s32.totalorder %s24, 0
        // Predicated region
        $region33: #{tpu_custom_call.1} parent=31 // pred_check
          %p326 = pneg %p325
        $region34: #{tpu_custom_call.1} parent=31 // pred_check_branch
          %328 = sbr.rel (%p326) target = $region36
        $region35: #{tpu_custom_call.1} parent=31 // pred_region
          %v329 = vld [vmem:[%s301] sm:$0xff]
          %v330 = vld [vmem:[%s301 + $0x8] sm:$0xff]
          %v331 = vld [vmem:[%s301 + $0x10] sm:$0xff]
          %v332 = vld [vmem:[%s301 + $0x18] sm:$0xff]
          %v333 = vld [vmem:[%s301 + $0x20] sm:$0xff]
          %v334 = vld [vmem:[%s301 + $0x28] sm:$0xff]
          %v335 = vld [vmem:[%s301 + $0x30] sm:$0xff]
          %v336 = vld [vmem:[%s301 + $0x38] sm:$0xff]
          %v337 = vld [vmem:[%s301 + $0x40] sm:$0xff]
          %v338 = vld [vmem:[%s301 + $0x48] sm:$0xff]
          %v339 = vld [vmem:[%s301 + $0x50] sm:$0xff]
          %v340 = vld [vmem:[%s301 + $0x58] sm:$0xff]
          %v341 = vld [vmem:[%s301 + $0x60] sm:$0xff]
          %v342 = vld [vmem:[%s301 + $0x68] sm:$0xff]
          %v343 = vld [vmem:[%s301 + $0x70] sm:$0xff]
          %v344 = vld [vmem:[%s301 + $0x78] sm:$0xff]
          %vm345 = vcmask 261120
          %346 = vst.msk [vmem:[#allocation2] sm:$0xff] %vm345, %v329
          %347 = vst.msk [vmem:[#allocation2 + $0x8] sm:$0xff] %vm345, %v330
          %348 = vst.msk [vmem:[#allocation2 + $0x10] sm:$0xff] %vm345, %v331
          %349 = vst.msk [vmem:[#allocation2 + $0x18] sm:$0xff] %vm345, %v332
          %350 = vst.msk [vmem:[#allocation2 + $0x20] sm:$0xff] %vm345, %v333
          %351 = vst.msk [vmem:[#allocation2 + $0x28] sm:$0xff] %vm345, %v334
          %352 = vst.msk [vmem:[#allocation2 + $0x30] sm:$0xff] %vm345, %v335
          %353 = vst.msk [vmem:[#allocation2 + $0x38] sm:$0xff] %vm345, %v336
          %354 = vst.msk [vmem:[#allocation2 + $0x40] sm:$0xff] %vm345, %v337
          %355 = vst.msk [vmem:[#allocation2 + $0x48] sm:$0xff] %vm345, %v338
          %356 = vst.msk [vmem:[#allocation2 + $0x50] sm:$0xff] %vm345, %v339
          %357 = vst.msk [vmem:[#allocation2 + $0x58] sm:$0xff] %vm345, %v340
          %358 = vst.msk [vmem:[#allocation2 + $0x60] sm:$0xff] %vm345, %v341
          %359 = vst.msk [vmem:[#allocation2 + $0x68] sm:$0xff] %vm345, %v342
          %360 = vst.msk [vmem:[#allocation2 + $0x70] sm:$0xff] %vm345, %v343
          %361 = vst.msk [vmem:[#allocation2 + $0x78] sm:$0xff] %vm345, %v344
          %362 = vst.msk [vmem:[%s315] sm:$0xff] %vm345, 0.0
          %363 = vst.msk [vmem:[%s315 + $0x8] sm:$0xff] %vm345, 0.0
          %364 = vst.msk [vmem:[%s315 + $0x10] sm:$0xff] %vm345, 0.0
          %365 = vst.msk [vmem:[%s315 + $0x18] sm:$0xff] %vm345, 0.0
          %366 = vst.msk [vmem:[%s315 + $0x20] sm:$0xff] %vm345, 0.0
          %367 = vst.msk [vmem:[%s315 + $0x28] sm:$0xff] %vm345, 0.0
          %368 = vst.msk [vmem:[%s315 + $0x30] sm:$0xff] %vm345, 0.0
          %369 = vst.msk [vmem:[%s315 + $0x38] sm:$0xff] %vm345, 0.0
          %370 = vst.msk [vmem:[%s315 + $0x40] sm:$0xff] %vm345, 0.0
          %371 = vst.msk [vmem:[%s315 + $0x48] sm:$0xff] %vm345, 0.0
          %372 = vst.msk [vmem:[%s315 + $0x50] sm:$0xff] %vm345, 0.0
          %373 = vst.msk [vmem:[%s315 + $0x58] sm:$0xff] %vm345, 0.0
          %374 = vst.msk [vmem:[%s315 + $0x60] sm:$0xff] %vm345, 0.0
          %375 = vst.msk [vmem:[%s315 + $0x68] sm:$0xff] %vm345, 0.0
          %376 = vst.msk [vmem:[%s315 + $0x70] sm:$0xff] %vm345, 0.0
          %377 = vst.msk [vmem:[%s315 + $0x78] sm:$0xff] %vm345, 0.0
        $region36: #{tpu_custom_call.1} parent=31 // pred_fallthru
          _
        %v378 = vld [vmem:[#allocation2] sm:$0xff]
        %v379 = vld [vmem:[#allocation2 + $0x8] sm:$0xff]
        %v380 = vld [vmem:[#allocation2 + $0x10] sm:$0xff]
        %v381 = vld [vmem:[#allocation2 + $0x18] sm:$0xff]
        %v382 = vld [vmem:[#allocation2 + $0x20] sm:$0xff]
        %v383 = vld [vmem:[#allocation2 + $0x28] sm:$0xff]
        %v384 = vld [vmem:[#allocation2 + $0x30] sm:$0xff]
        %v385 = vld [vmem:[#allocation2 + $0x38] sm:$0xff]
        %v386 = vld [vmem:[#allocation2 + $0x40] sm:$0xff]
        %v387 = vld [vmem:[#allocation2 + $0x48] sm:$0xff]
        %v388 = vld [vmem:[#allocation2 + $0x50] sm:$0xff]
        %v389 = vld [vmem:[#allocation2 + $0x58] sm:$0xff]
        %v390 = vld [vmem:[#allocation2 + $0x60] sm:$0xff]
        %v391 = vld [vmem:[#allocation2 + $0x68] sm:$0xff]
        %v392 = vld [vmem:[#allocation2 + $0x70] sm:$0xff]
        %v393 = vld [vmem:[#allocation2 + $0x78] sm:$0xff]
        %v394 = vld [vmem:[%s307] sm:$0xff]
        %v395 = vld [vmem:[%s307 + $0x8] sm:$0xff]
        %v396 = vld [vmem:[%s307 + $0x10] sm:$0xff]
        %v397 = vld [vmem:[%s307 + $0x18] sm:$0xff]
        %v398 = vld [vmem:[%s307 + $0x20] sm:$0xff]
        %v399 = vld [vmem:[%s307 + $0x28] sm:$0xff]
        %v400 = vld [vmem:[%s307 + $0x30] sm:$0xff]
        %v401 = vld [vmem:[%s307 + $0x38] sm:$0xff]
        %v402 = vld [vmem:[%s307 + $0x40] sm:$0xff]
        %v403 = vld [vmem:[%s307 + $0x48] sm:$0xff]
        %v404 = vld [vmem:[%s307 + $0x50] sm:$0xff]
        %v405 = vld [vmem:[%s307 + $0x58] sm:$0xff]
        %v406 = vld [vmem:[%s307 + $0x60] sm:$0xff]
        %v407 = vld [vmem:[%s307 + $0x68] sm:$0xff]
        %v408 = vld [vmem:[%s307 + $0x70] sm:$0xff]
        %v409 = vld [vmem:[%s307 + $0x78] sm:$0xff]
        %vm410 = vcmask 261120
        %v412 = vsel %vm410, %v378, 0
        %v415 = vsel %vm410, %v379, 0
        %v418 = vsel %vm410, %v380, 0
        %v421 = vsel %vm410, %v381, 0
        %v424 = vsel %vm410, %v382, 0
        %v427 = vsel %vm410, %v383, 0
        %v430 = vsel %vm410, %v384, 0
        %v433 = vsel %vm410, %v385, 0
        %v436 = vsel %vm410, %v386, 0
        %v439 = vsel %vm410, %v387, 0
        %v442 = vsel %vm410, %v388, 0
        %v445 = vsel %vm410, %v389, 0
        %v448 = vsel %vm410, %v390, 0
        %v451 = vsel %vm410, %v391, 0
        %v454 = vsel %vm410, %v392, 0
        %v457 = vsel %vm410, %v393, 0
        %v460 = vsel %vm410, %v394, 0
        %v463 = vsel %vm410, %v395, 0
        %v466 = vsel %vm410, %v396, 0
        %v469 = vsel %vm410, %v397, 0
        %v472 = vsel %vm410, %v398, 0
        %v475 = vsel %vm410, %v399, 0
        %v478 = vsel %vm410, %v400, 0
        %v481 = vsel %vm410, %v401, 0
        %v484 = vsel %vm410, %v402, 0
        %v487 = vsel %vm410, %v403, 0
        %v490 = vsel %vm410, %v404, 0
        %v493 = vsel %vm410, %v405, 0
        %v496 = vsel %vm410, %v406, 0
        %v499 = vsel %vm410, %v407, 0
        %v502 = vsel %vm410, %v408, 0
        %v505 = vsel %vm410, %v409, 0
        %507 = vmatpush.xpose.msra.mxu0 %v505
        %508 = vmatpush.xpose.msra.mxu0 %v502
        %509 = vmatpush.xpose.msra.mxu0 %v499
        %510 = vmatpush.xpose.msra.mxu0 %v496
        %511 = vmatpush.xpose.msra.mxu0 %v493
        %512 = vmatpush.xpose.msra.mxu0 %v490
        %513 = vmatpush.xpose.msra.mxu0 %v487
        %514 = vmatpush.xpose.msra.mxu0 %v484
        %515 = vmatpush.xpose.msra.mxu0 %v481
        %516 = vmatpush.xpose.msra.mxu0 %v478
        %517 = vmatpush.xpose.msra.mxu0 %v475
        %518 = vmatpush.xpose.msra.mxu0 %v472
        %519 = vmatpush.xpose.msra.mxu0 %v469
        %520 = vmatpush.xpose.msra.mxu0 %v466
        %521 = vmatpush.xpose.msra.mxu0 %v463
        %522 = vmatpush.xpose.msra.mxu0 %v460
        %523 = vmatmul.f32.gmra.mxu0 %v412
        %v524 = vpop.f32.mrf.mxu0
        %v525 = vadd.f32 0.0, %v524
        %526 = vmatmul.f32.gmra.mxu0 %v415
        %v527 = vpop.f32.mrf.mxu0
        %v528 = vadd.f32 0.0, %v527
        %529 = vmatmul.f32.gmra.mxu0 %v418
        %v530 = vpop.f32.mrf.mxu0
        %v531 = vadd.f32 0.0, %v530
        %532 = vmatmul.f32.gmra.mxu0 %v421
        %v533 = vpop.f32.mrf.mxu0
        %v534 = vadd.f32 0.0, %v533
        %535 = vmatmul.f32.gmra.mxu0 %v424
        %v536 = vpop.f32.mrf.mxu0
        %v537 = vadd.f32 0.0, %v536
        %538 = vmatmul.f32.gmra.mxu0 %v427
        %v539 = vpop.f32.mrf.mxu0
        %v540 = vadd.f32 0.0, %v539
        %541 = vmatmul.f32.gmra.mxu0 %v430
        %v542 = vpop.f32.mrf.mxu0
        %v543 = vadd.f32 0.0, %v542
        %544 = vmatmul.f32.gmra.mxu0 %v433
        %v545 = vpop.f32.mrf.mxu0
        %v546 = vadd.f32 0.0, %v545
        %547 = vmatmul.f32.gmra.mxu0 %v436
        %v548 = vpop.f32.mrf.mxu0
        %v549 = vadd.f32 0.0, %v548
        %550 = vmatmul.f32.gmra.mxu0 %v439
        %v551 = vpop.f32.mrf.mxu0
        %v552 = vadd.f32 0.0, %v551
        %553 = vmatmul.f32.gmra.mxu0 %v442
        %v554 = vpop.f32.mrf.mxu0
        %v555 = vadd.f32 0.0, %v554
        %556 = vmatmul.f32.gmra.mxu0 %v445
        %v557 = vpop.f32.mrf.mxu0
        %v558 = vadd.f32 0.0, %v557
        %559 = vmatmul.f32.gmra.mxu0 %v448
        %v560 = vpop.f32.mrf.mxu0
        %v561 = vadd.f32 0.0, %v560
        %562 = vmatmul.f32.gmra.mxu0 %v451
        %v563 = vpop.f32.mrf.mxu0
        %v564 = vadd.f32 0.0, %v563
        %565 = vmatmul.f32.gmra.mxu0 %v454
        %v566 = vpop.f32.mrf.mxu0
        %v567 = vadd.f32 0.0, %v566
        %568 = vmatmul.f32.gmra.mxu0 %v457
        %v569 = vpop.f32.mrf.mxu0
        %v570 = vadd.f32 0.0, %v569
        %571 = vdwg.mxu0
        %v572 = vld [vmem:[%s310] sm:$0x1]
        %v573 = vmul.f32 %v525, 2.0
        %v574 = vmul.f32 %v528, 2.0
        %v575 = vmul.f32 %v531, 2.0
        %v576 = vmul.f32 %v534, 2.0
        %v577 = vmul.f32 %v537, 2.0
        %v578 = vmul.f32 %v540, 2.0
        %v579 = vmul.f32 %v543, 2.0
        %v580 = vmul.f32 %v546, 2.0
        %v581 = vmul.f32 %v549, 2.0
        %v582 = vmul.f32 %v552, 2.0
        %v583 = vmul.f32 %v555, 2.0
        %v584 = vmul.f32 %v558, 2.0
        %v585 = vmul.f32 %v561, 2.0
        %v586 = vmul.f32 %v564, 2.0
        %v587 = vmul.f32 %v567, 2.0
        %v588 = vmul.f32 %v570, 2.0
        %v590 = vperm.slane %v572, 0
        %v592 = vsub.f32 %v590, %v573
        %v593 = vsub.f32 %v590, %v574
        %v594 = vsub.f32 %v590, %v575
        %v595 = vsub.f32 %v590, %v576
        %v596 = vsub.f32 %v590, %v577
        %v597 = vsub.f32 %v590, %v578
        %v598 = vsub.f32 %v590, %v579
        %v599 = vsub.f32 %v590, %v580
        %v600 = vsub.f32 %v590, %v581
        %v601 = vsub.f32 %v590, %v582
        %v602 = vsub.f32 %v590, %v583
        %v603 = vsub.f32 %v590, %v584
        %v604 = vsub.f32 %v590, %v585
        %v605 = vsub.f32 %v590, %v586
        %v606 = vsub.f32 %v590, %v587
        %v607 = vsub.f32 %v590, %v588
        %v608 = vlaneseq
        %v609 = vand.u32 %v608, 127
        %610 = vmin.xlane.f32.xlu0 %v592
        %v611 = vpop.xlane.xlu0 %610
        %612 = vmin.xlane.f32.xlu0 %v593
        %v613 = vpop.xlane.xlu0 %612
        %614 = vmin.xlane.f32.xlu0 %v594
        %v615 = vpop.xlane.xlu0 %614
        %616 = vmin.xlane.f32.xlu0 %v595
        %v617 = vpop.xlane.xlu0 %616
        %618 = vmin.xlane.f32.xlu0 %v596
        %v619 = vpop.xlane.xlu0 %618
        %620 = vmin.xlane.f32.xlu0 %v597
        %v621 = vpop.xlane.xlu0 %620
        %622 = vmin.xlane.f32.xlu0 %v598
        %v623 = vpop.xlane.xlu0 %622
        %624 = vmin.xlane.f32.xlu0 %v599
        %v625 = vpop.xlane.xlu0 %624
        %626 = vmin.xlane.f32.xlu0 %v600
        %v627 = vpop.xlane.xlu0 %626
        %628 = vmin.xlane.f32.xlu0 %v601
        %v629 = vpop.xlane.xlu0 %628
        %630 = vmin.xlane.f32.xlu0 %v602
        %v631 = vpop.xlane.xlu0 %630
        %632 = vmin.xlane.f32.xlu0 %v603
        %v633 = vpop.xlane.xlu0 %632
        %634 = vmin.xlane.f32.xlu0 %v604
        %v635 = vpop.xlane.xlu0 %634
        %636 = vmin.xlane.f32.xlu0 %v605
        %v637 = vpop.xlane.xlu0 %636
        %638 = vmin.xlane.f32.xlu0 %v606
        %v639 = vpop.xlane.xlu0 %638
        %640 = vmin.xlane.f32.xlu0 %v607
        %v641 = vpop.xlane.xlu0 %640
        %vm642 = vcmp.le.f32.partialorder %v592, %v611
        %vm643 = vcmp.le.f32.partialorder %v593, %v613
        %vm644 = vcmp.le.f32.partialorder %v594, %v615
        %vm645 = vcmp.le.f32.partialorder %v595, %v617
        %vm646 = vcmp.le.f32.partialorder %v596, %v619
        %vm647 = vcmp.le.f32.partialorder %v597, %v621
        %vm648 = vcmp.le.f32.partialorder %v598, %v623
        %vm649 = vcmp.le.f32.partialorder %v599, %v625
        %vm650 = vcmp.le.f32.partialorder %v600, %v627
        %vm651 = vcmp.le.f32.partialorder %v601, %v629
        %vm652 = vcmp.le.f32.partialorder %v602, %v631
        %vm653 = vcmp.le.f32.partialorder %v603, %v633
        %vm654 = vcmp.le.f32.partialorder %v604, %v635
        %vm655 = vcmp.le.f32.partialorder %v605, %v637
        %vm656 = vcmp.le.f32.partialorder %v606, %v639
        %vm657 = vcmp.le.f32.partialorder %v607, %v641
        %v658 = vsel %vm642, %v609, 128
        %v659 = vsel %vm643, %v609, 128
        %v660 = vsel %vm644, %v609, 128
        %v661 = vsel %vm645, %v609, 128
        %v662 = vsel %vm646, %v609, 128
        %v663 = vsel %vm647, %v609, 128
        %v664 = vsel %vm648, %v609, 128
        %v665 = vsel %vm649, %v609, 128
        %v666 = vsel %vm650, %v609, 128
        %v667 = vsel %vm651, %v609, 128
        %v668 = vsel %vm652, %v609, 128
        %v669 = vsel %vm653, %v609, 128
        %v670 = vsel %vm654, %v609, 128
        %v671 = vsel %vm655, %v609, 128
        %v672 = vsel %vm656, %v609, 128
        %v673 = vsel %vm657, %v609, 128
        %v674 = vand.u32 %v658, 65535
        %v675 = vshra.s32 %v658, 16
        %v676 = vcvt.s32.f32 %v674
        %v677 = vcvt.s32.f32 %v675
        %678 = vmin.xlane.f32.xlu0 %v677
        %v679 = vpop.xlane.xlu0 %678
        %vm680 = vcmp.eq.f32.partialorder %v677, %v679
        %v681 = vsel %vm680, %v676, inf
        %682 = vmin.xlane.f32.xlu0 %v681
        %v683 = vpop.xlane.xlu0 %682
        %v684 = vcvt.f32.s32 %v683
        %v685 = vcvt.f32.s32 %v679
        %v686 = vshll.u32 %v685, 16
        %v687 = vadd.s32 %v686, %v684
        %v688 = vand.u32 %v659, 65535
        %v689 = vshra.s32 %v659, 16
        %v690 = vcvt.s32.f32 %v688
        %v691 = vcvt.s32.f32 %v689
        %692 = vmin.xlane.f32.xlu0 %v691
        %v693 = vpop.xlane.xlu0 %692
        %vm694 = vcmp.eq.f32.partialorder %v691, %v693
        %v695 = vsel %vm694, %v690, inf
        %696 = vmin.xlane.f32.xlu0 %v695
        %v697 = vpop.xlane.xlu0 %696
        %v698 = vcvt.f32.s32 %v697
        %v699 = vcvt.f32.s32 %v693
        %v700 = vshll.u32 %v699, 16
        %v701 = vadd.s32 %v700, %v698
        %v702 = vand.u32 %v660, 65535
        %v703 = vshra.s32 %v660, 16
        %v704 = vcvt.s32.f32 %v702
        %v705 = vcvt.s32.f32 %v703
        %706 = vmin.xlane.f32.xlu0 %v705
        %v707 = vpop.xlane.xlu0 %706
        %vm708 = vcmp.eq.f32.partialorder %v705, %v707
        %v709 = vsel %vm708, %v704, inf
        %710 = vmin.xlane.f32.xlu0 %v709
        %v711 = vpop.xlane.xlu0 %710
        %v712 = vcvt.f32.s32 %v711
        %v713 = vcvt.f32.s32 %v707
        %v714 = vshll.u32 %v713, 16
        %v715 = vadd.s32 %v714, %v712
        %v716 = vand.u32 %v661, 65535
        %v717 = vshra.s32 %v661, 16
        %v718 = vcvt.s32.f32 %v716
        %v719 = vcvt.s32.f32 %v717
        %720 = vmin.xlane.f32.xlu0 %v719
        %v721 = vpop.xlane.xlu0 %720
        %vm722 = vcmp.eq.f32.partialorder %v719, %v721
        %v723 = vsel %vm722, %v718, inf
        %724 = vmin.xlane.f32.xlu0 %v723
        %v725 = vpop.xlane.xlu0 %724
        %v726 = vcvt.f32.s32 %v725
        %v727 = vcvt.f32.s32 %v721
        %v728 = vshll.u32 %v727, 16
        %v729 = vadd.s32 %v728, %v726
        %v730 = vand.u32 %v662, 65535
        %v731 = vshra.s32 %v662, 16
        %v732 = vcvt.s32.f32 %v730
        %v733 = vcvt.s32.f32 %v731
        %734 = vmin.xlane.f32.xlu0 %v733
        %v735 = vpop.xlane.xlu0 %734
        %vm736 = vcmp.eq.f32.partialorder %v733, %v735
        %v737 = vsel %vm736, %v732, inf
        %738 = vmin.xlane.f32.xlu0 %v737
        %v739 = vpop.xlane.xlu0 %738
        %v740 = vcvt.f32.s32 %v739
        %v741 = vcvt.f32.s32 %v735
        %v742 = vshll.u32 %v741, 16
        %v743 = vadd.s32 %v742, %v740
        %v744 = vand.u32 %v663, 65535
        %v745 = vshra.s32 %v663, 16
        %v746 = vcvt.s32.f32 %v744
        %v747 = vcvt.s32.f32 %v745
        %748 = vmin.xlane.f32.xlu0 %v747
        %v749 = vpop.xlane.xlu0 %748
        %vm750 = vcmp.eq.f32.partialorder %v747, %v749
        %v751 = vsel %vm750, %v746, inf
        %752 = vmin.xlane.f32.xlu0 %v751
        %v753 = vpop.xlane.xlu0 %752
        %v754 = vcvt.f32.s32 %v753
        %v755 = vcvt.f32.s32 %v749
        %v756 = vshll.u32 %v755, 16
        %v757 = vadd.s32 %v756, %v754
        %v758 = vand.u32 %v664, 65535
        %v759 = vshra.s32 %v664, 16
        %v760 = vcvt.s32.f32 %v758
        %v761 = vcvt.s32.f32 %v759
        %762 = vmin.xlane.f32.xlu0 %v761
        %v763 = vpop.xlane.xlu0 %762
        %vm764 = vcmp.eq.f32.partialorder %v761, %v763
        %v765 = vsel %vm764, %v760, inf
        %766 = vmin.xlane.f32.xlu0 %v765
        %v767 = vpop.xlane.xlu0 %766
        %v768 = vcvt.f32.s32 %v767
        %v769 = vcvt.f32.s32 %v763
        %v770 = vshll.u32 %v769, 16
        %v771 = vadd.s32 %v770, %v768
        %v772 = vand.u32 %v665, 65535
        %v773 = vshra.s32 %v665, 16
        %v774 = vcvt.s32.f32 %v772
        %v775 = vcvt.s32.f32 %v773
        %776 = vmin.xlane.f32.xlu0 %v775
        %v777 = vpop.xlane.xlu0 %776
        %vm778 = vcmp.eq.f32.partialorder %v775, %v777
        %v779 = vsel %vm778, %v774, inf
        %780 = vmin.xlane.f32.xlu0 %v779
        %v781 = vpop.xlane.xlu0 %780
        %v782 = vcvt.f32.s32 %v781
        %v783 = vcvt.f32.s32 %v777
        %v784 = vshll.u32 %v783, 16
        %v785 = vadd.s32 %v784, %v782
        %v786 = vand.u32 %v666, 65535
        %v787 = vshra.s32 %v666, 16
        %v788 = vcvt.s32.f32 %v786
        %v789 = vcvt.s32.f32 %v787
        %790 = vmin.xlane.f32.xlu0 %v789
        %v791 = vpop.xlane.xlu0 %790
        %vm792 = vcmp.eq.f32.partialorder %v789, %v791
        %v793 = vsel %vm792, %v788, inf
        %794 = vmin.xlane.f32.xlu0 %v793
        %v795 = vpop.xlane.xlu0 %794
        %v796 = vcvt.f32.s32 %v795
        %v797 = vcvt.f32.s32 %v791
        %v798 = vshll.u32 %v797, 16
        %v799 = vadd.s32 %v798, %v796
        %v800 = vand.u32 %v667, 65535
        %v801 = vshra.s32 %v667, 16
        %v802 = vcvt.s32.f32 %v800
        %v803 = vcvt.s32.f32 %v801
        %804 = vmin.xlane.f32.xlu0 %v803
        %v805 = vpop.xlane.xlu0 %804
        %vm806 = vcmp.eq.f32.partialorder %v803, %v805
        %v807 = vsel %vm806, %v802, inf
        %808 = vmin.xlane.f32.xlu0 %v807
        %v809 = vpop.xlane.xlu0 %808
        %v810 = vcvt.f32.s32 %v809
        %v811 = vcvt.f32.s32 %v805
        %v812 = vshll.u32 %v811, 16
        %v813 = vadd.s32 %v812, %v810
        %v814 = vand.u32 %v668, 65535
        %v815 = vshra.s32 %v668, 16
        %v816 = vcvt.s32.f32 %v814
        %v817 = vcvt.s32.f32 %v815
        %818 = vmin.xlane.f32.xlu0 %v817
        %v819 = vpop.xlane.xlu0 %818
        %vm820 = vcmp.eq.f32.partialorder %v817, %v819
        %v821 = vsel %vm820, %v816, inf
        %822 = vmin.xlane.f32.xlu0 %v821
        %v823 = vpop.xlane.xlu0 %822
        %v824 = vcvt.f32.s32 %v823
        %v825 = vcvt.f32.s32 %v819
        %v826 = vshll.u32 %v825, 16
        %v827 = vadd.s32 %v826, %v824
        %v828 = vand.u32 %v669, 65535
        %v829 = vshra.s32 %v669, 16
        %v830 = vcvt.s32.f32 %v828
        %v831 = vcvt.s32.f32 %v829
        %832 = vmin.xlane.f32.xlu0 %v831
        %v833 = vpop.xlane.xlu0 %832
        %vm834 = vcmp.eq.f32.partialorder %v831, %v833
        %v835 = vsel %vm834, %v830, inf
        %836 = vmin.xlane.f32.xlu0 %v835
        %v837 = vpop.xlane.xlu0 %836
        %v838 = vcvt.f32.s32 %v837
        %v839 = vcvt.f32.s32 %v833
        %v840 = vshll.u32 %v839, 16
        %v841 = vadd.s32 %v840, %v838
        %v842 = vand.u32 %v670, 65535
        %v843 = vshra.s32 %v670, 16
        %v844 = vcvt.s32.f32 %v842
        %v845 = vcvt.s32.f32 %v843
        %846 = vmin.xlane.f32.xlu0 %v845
        %v847 = vpop.xlane.xlu0 %846
        %vm848 = vcmp.eq.f32.partialorder %v845, %v847
        %v849 = vsel %vm848, %v844, inf
        %850 = vmin.xlane.f32.xlu0 %v849
        %v851 = vpop.xlane.xlu0 %850
        %v852 = vcvt.f32.s32 %v851
        %v853 = vcvt.f32.s32 %v847
        %v854 = vshll.u32 %v853, 16
        %v855 = vadd.s32 %v854, %v852
        %v856 = vand.u32 %v671, 65535
        %v857 = vshra.s32 %v671, 16
        %v858 = vcvt.s32.f32 %v856
        %v859 = vcvt.s32.f32 %v857
        %860 = vmin.xlane.f32.xlu0 %v859
        %v861 = vpop.xlane.xlu0 %860
        %vm862 = vcmp.eq.f32.partialorder %v859, %v861
        %v863 = vsel %vm862, %v858, inf
        %864 = vmin.xlane.f32.xlu0 %v863
        %v865 = vpop.xlane.xlu0 %864
        %v866 = vcvt.f32.s32 %v865
        %v867 = vcvt.f32.s32 %v861
        %v868 = vshll.u32 %v867, 16
        %v869 = vadd.s32 %v868, %v866
        %v870 = vand.u32 %v672, 65535
        %v871 = vshra.s32 %v672, 16
        %v872 = vcvt.s32.f32 %v870
        %v873 = vcvt.s32.f32 %v871
        %874 = vmin.xlane.f32.xlu0 %v873
        %v875 = vpop.xlane.xlu0 %874
        %vm876 = vcmp.eq.f32.partialorder %v873, %v875
        %v877 = vsel %vm876, %v872, inf
        %878 = vmin.xlane.f32.xlu0 %v877
        %v879 = vpop.xlane.xlu0 %878
        %v880 = vcvt.f32.s32 %v879
        %v881 = vcvt.f32.s32 %v875
        %v882 = vshll.u32 %v881, 16
        %v883 = vadd.s32 %v882, %v880
        %v884 = vand.u32 %v673, 65535
        %v885 = vshra.s32 %v673, 16
        %v886 = vcvt.s32.f32 %v884
        %v887 = vcvt.s32.f32 %v885
        %888 = vmin.xlane.f32.xlu0 %v887
        %v889 = vpop.xlane.xlu0 %888
        %vm890 = vcmp.eq.f32.partialorder %v887, %v889
        %v891 = vsel %vm890, %v886, inf
        %892 = vmin.xlane.f32.xlu0 %v891
        %v893 = vpop.xlane.xlu0 %892
        %v894 = vcvt.f32.s32 %v893
        %v895 = vcvt.f32.s32 %v889
        %v896 = vshll.u32 %v895, 16
        %v897 = vadd.s32 %v896, %v894
        %vm898 = vcmp.eq.s32.totalorder %v609, %v687
        %vm899 = vcmp.eq.s32.totalorder %v609, %v701
        %vm900 = vcmp.eq.s32.totalorder %v609, %v715
        %vm901 = vcmp.eq.s32.totalorder %v609, %v729
        %vm902 = vcmp.eq.s32.totalorder %v609, %v743
        %vm903 = vcmp.eq.s32.totalorder %v609, %v757
        %vm904 = vcmp.eq.s32.totalorder %v609, %v771
        %vm905 = vcmp.eq.s32.totalorder %v609, %v785
        %vm906 = vcmp.eq.s32.totalorder %v609, %v799
        %vm907 = vcmp.eq.s32.totalorder %v609, %v813
        %vm908 = vcmp.eq.s32.totalorder %v609, %v827
        %vm909 = vcmp.eq.s32.totalorder %v609, %v841
        %vm910 = vcmp.eq.s32.totalorder %v609, %v855
        %vm911 = vcmp.eq.s32.totalorder %v609, %v869
        %vm912 = vcmp.eq.s32.totalorder %v609, %v883
        %vm913 = vcmp.eq.s32.totalorder %v609, %v897
        %v914 = vsel %vm898, 1, 0
        %v915 = vsel %vm899, 1, 0
        %v916 = vsel %vm900, 1, 0
        %v917 = vsel %vm901, 1, 0
        %v918 = vsel %vm902, 1, 0
        %v919 = vsel %vm903, 1, 0
        %v920 = vsel %vm904, 1, 0
        %v921 = vsel %vm905, 1, 0
        %v922 = vsel %vm906, 1, 0
        %v923 = vsel %vm907, 1, 0
        %v924 = vsel %vm908, 1, 0
        %v925 = vsel %vm909, 1, 0
        %v926 = vsel %vm910, 1, 0
        %v927 = vsel %vm911, 1, 0
        %v928 = vsel %vm912, 1, 0
        %v929 = vsel %vm913, 1, 0
        %v930 = vcvt.s32.f32 %v914
        %v931 = vcvt.s32.f32 %v915
        %v932 = vcvt.s32.f32 %v916
        %v933 = vcvt.s32.f32 %v917
        %v934 = vcvt.s32.f32 %v918
        %v935 = vcvt.s32.f32 %v919
        %v936 = vcvt.s32.f32 %v920
        %v937 = vcvt.s32.f32 %v921
        %v938 = vcvt.s32.f32 %v922
        %v939 = vcvt.s32.f32 %v923
        %v940 = vcvt.s32.f32 %v924
        %v941 = vcvt.s32.f32 %v925
        %v942 = vcvt.s32.f32 %v926
        %v943 = vcvt.s32.f32 %v927
        %v944 = vcvt.s32.f32 %v928
        %v945 = vcvt.s32.f32 %v929
        %946 = vmatpush.msra.mxu0 %v409
        %947 = vmatpush.msra.mxu0 %v408
        %948 = vmatpush.msra.mxu0 %v407
        %949 = vmatpush.msra.mxu0 %v406
        %950 = vmatpush.msra.mxu0 %v405
        %951 = vmatpush.msra.mxu0 %v404
        %952 = vmatpush.msra.mxu0 %v403
        %953 = vmatpush.msra.mxu0 %v402
        %954 = vmatpush.msra.mxu0 %v401
        %955 = vmatpush.msra.mxu0 %v400
        %956 = vmatpush.msra.mxu0 %v399
        %957 = vmatpush.msra.mxu0 %v398
        %958 = vmatpush.msra.mxu0 %v397
        %959 = vmatpush.msra.mxu0 %v396
        %960 = vmatpush.msra.mxu0 %v395
        %961 = vmatpush.msra.mxu0 %v394
        %962 = vmatmul.f32.gmra.mxu0 %v930
        %v963 = vpop.f32.mrf.mxu0
        %v964 = vadd.f32 0.0, %v963
        %965 = vmatmul.f32.gmra.mxu0 %v931
        %v966 = vpop.f32.mrf.mxu0
        %v967 = vadd.f32 0.0, %v966
        %968 = vmatmul.f32.gmra.mxu0 %v932
        %v969 = vpop.f32.mrf.mxu0
        %v970 = vadd.f32 0.0, %v969
        %971 = vmatmul.f32.gmra.mxu0 %v933
        %v972 = vpop.f32.mrf.mxu0
        %v973 = vadd.f32 0.0, %v972
        %974 = vmatmul.f32.gmra.mxu0 %v934
        %v975 = vpop.f32.mrf.mxu0
        %v976 = vadd.f32 0.0, %v975
        %977 = vmatmul.f32.gmra.mxu0 %v935
        %v978 = vpop.f32.mrf.mxu0
        %v979 = vadd.f32 0.0, %v978
        %980 = vmatmul.f32.gmra.mxu0 %v936
        %v981 = vpop.f32.mrf.mxu0
        %v982 = vadd.f32 0.0, %v981
        %983 = vmatmul.f32.gmra.mxu0 %v937
        %v984 = vpop.f32.mrf.mxu0
        %v985 = vadd.f32 0.0, %v984
        %986 = vmatmul.f32.gmra.mxu0 %v938
        %v987 = vpop.f32.mrf.mxu0
        %v988 = vadd.f32 0.0, %v987
        %989 = vmatmul.f32.gmra.mxu0 %v939
        %v990 = vpop.f32.mrf.mxu0
        %v991 = vadd.f32 0.0, %v990
        %992 = vmatmul.f32.gmra.mxu0 %v940
        %v993 = vpop.f32.mrf.mxu0
        %v994 = vadd.f32 0.0, %v993
        %995 = vmatmul.f32.gmra.mxu0 %v941
        %v996 = vpop.f32.mrf.mxu0
        %v997 = vadd.f32 0.0, %v996
        %998 = vmatmul.f32.gmra.mxu0 %v942
        %v999 = vpop.f32.mrf.mxu0
        %v1000 = vadd.f32 0.0, %v999
        %1001 = vmatmul.f32.gmra.mxu0 %v943
        %v1002 = vpop.f32.mrf.mxu0
        %v1003 = vadd.f32 0.0, %v1002
        %1004 = vmatmul.f32.gmra.mxu0 %v944
        %v1005 = vpop.f32.mrf.mxu0
        %v1006 = vadd.f32 0.0, %v1005
        %1007 = vmatmul.f32.gmra.mxu0 %v945
        %v1008 = vpop.f32.mrf.mxu0
        %v1009 = vadd.f32 0.0, %v1008
        %1010 = vdwg.mxu0
        %v1011 = vsub.f32 %v378, %v964
        %v1012 = vsub.f32 %v379, %v967
        %v1013 = vsub.f32 %v380, %v970
        %v1014 = vsub.f32 %v381, %v973
        %v1015 = vsub.f32 %v382, %v976
        %v1016 = vsub.f32 %v383, %v979
        %v1017 = vsub.f32 %v384, %v982
        %v1018 = vsub.f32 %v385, %v985
        %v1019 = vsub.f32 %v386, %v988
        %v1020 = vsub.f32 %v387, %v991
        %v1021 = vsub.f32 %v388, %v994
        %v1022 = vsub.f32 %v389, %v997
        %v1023 = vsub.f32 %v390, %v1000
        %v1024 = vsub.f32 %v391, %v1003
        %v1025 = vsub.f32 %v392, %v1006
        %v1026 = vsub.f32 %v393, %v1009
        %1027 = vst.msk [vmem:[#allocation2] sm:$0xff] %vm410, %v1011
        %1028 = vst.msk [vmem:[#allocation2 + $0x8] sm:$0xff] %vm410, %v1012
        %1029 = vst.msk [vmem:[#allocation2 + $0x10] sm:$0xff] %vm410, %v1013
        %1030 = vst.msk [vmem:[#allocation2 + $0x18] sm:$0xff] %vm410, %v1014
        %1031 = vst.msk [vmem:[#allocation2 + $0x20] sm:$0xff] %vm410, %v1015
        %1032 = vst.msk [vmem:[#allocation2 + $0x28] sm:$0xff] %vm410, %v1016
        %1033 = vst.msk [vmem:[#allocation2 + $0x30] sm:$0xff] %vm410, %v1017
        %1034 = vst.msk [vmem:[#allocation2 + $0x38] sm:$0xff] %vm410, %v1018
        %1035 = vst.msk [vmem:[#allocation2 + $0x40] sm:$0xff] %vm410, %v1019
        %1036 = vst.msk [vmem:[#allocation2 + $0x48] sm:$0xff] %vm410, %v1020
        %1037 = vst.msk [vmem:[#allocation2 + $0x50] sm:$0xff] %vm410, %v1021
        %1038 = vst.msk [vmem:[#allocation2 + $0x58] sm:$0xff] %vm410, %v1022
        %1039 = vst.msk [vmem:[#allocation2 + $0x60] sm:$0xff] %vm410, %v1023
        %1040 = vst.msk [vmem:[#allocation2 + $0x68] sm:$0xff] %vm410, %v1024
        %1041 = vst.msk [vmem:[#allocation2 + $0x70] sm:$0xff] %vm410, %v1025
        %1042 = vst.msk [vmem:[#allocation2 + $0x78] sm:$0xff] %vm410, %v1026
        %v1043 = vld [vmem:[%s315] sm:$0xff]
        %v1044 = vld [vmem:[%s315 + $0x8] sm:$0xff]
        %v1045 = vld [vmem:[%s315 + $0x10] sm:$0xff]
        %v1046 = vld [vmem:[%s315 + $0x18] sm:$0xff]
        %v1047 = vld [vmem:[%s315 + $0x20] sm:$0xff]
        %v1048 = vld [vmem:[%s315 + $0x28] sm:$0xff]
        %v1049 = vld [vmem:[%s315 + $0x30] sm:$0xff]
        %v1050 = vld [vmem:[%s315 + $0x38] sm:$0xff]
        %v1051 = vld [vmem:[%s315 + $0x40] sm:$0xff]
        %v1052 = vld [vmem:[%s315 + $0x48] sm:$0xff]
        %v1053 = vld [vmem:[%s315 + $0x50] sm:$0xff]
        %v1054 = vld [vmem:[%s315 + $0x58] sm:$0xff]
        %v1055 = vld [vmem:[%s315 + $0x60] sm:$0xff]
        %v1056 = vld [vmem:[%s315 + $0x68] sm:$0xff]
        %v1057 = vld [vmem:[%s315 + $0x70] sm:$0xff]
        %v1058 = vld [vmem:[%s315 + $0x78] sm:$0xff]
        %v1059 = vadd.f32 %v1043, %v964
        %v1060 = vadd.f32 %v1044, %v967
        %v1061 = vadd.f32 %v1045, %v970
        %v1062 = vadd.f32 %v1046, %v973
        %v1063 = vadd.f32 %v1047, %v976
        %v1064 = vadd.f32 %v1048, %v979
        %v1065 = vadd.f32 %v1049, %v982
        %v1066 = vadd.f32 %v1050, %v985
        %v1067 = vadd.f32 %v1051, %v988
        %v1068 = vadd.f32 %v1052, %v991
        %v1069 = vadd.f32 %v1053, %v994
        %v1070 = vadd.f32 %v1054, %v997
        %v1071 = vadd.f32 %v1055, %v1000
        %v1072 = vadd.f32 %v1056, %v1003
        %v1073 = vadd.f32 %v1057, %v1006
        %v1074 = vadd.f32 %v1058, %v1009
        %1075 = vst.msk [vmem:[%s315] sm:$0xff] %vm410, %v1059
        %1076 = vst.msk [vmem:[%s315 + $0x8] sm:$0xff] %vm410, %v1060
        %1077 = vst.msk [vmem:[%s315 + $0x10] sm:$0xff] %vm410, %v1061
        %1078 = vst.msk [vmem:[%s315 + $0x18] sm:$0xff] %vm410, %v1062
        %1079 = vst.msk [vmem:[%s315 + $0x20] sm:$0xff] %vm410, %v1063
        %1080 = vst.msk [vmem:[%s315 + $0x28] sm:$0xff] %vm410, %v1064
        %1081 = vst.msk [vmem:[%s315 + $0x30] sm:$0xff] %vm410, %v1065
        %1082 = vst.msk [vmem:[%s315 + $0x38] sm:$0xff] %vm410, %v1066
        %1083 = vst.msk [vmem:[%s315 + $0x40] sm:$0xff] %vm410, %v1067
        %1084 = vst.msk [vmem:[%s315 + $0x48] sm:$0xff] %vm410, %v1068
        %1085 = vst.msk [vmem:[%s315 + $0x50] sm:$0xff] %vm410, %v1069
        %1086 = vst.msk [vmem:[%s315 + $0x58] sm:$0xff] %vm410, %v1070
        %1087 = vst.msk [vmem:[%s315 + $0x60] sm:$0xff] %vm410, %v1071
        %1088 = vst.msk [vmem:[%s315 + $0x68] sm:$0xff] %vm410, %v1072
        %1089 = vst.msk [vmem:[%s315 + $0x70] sm:$0xff] %vm410, %v1073
        %1090 = vst.msk [vmem:[%s315 + $0x78] sm:$0xff] %vm410, %v1074
        %v1091 = vperm.slane %v687, %v609
        %v1092 = vadd.s32 %v609, 4294967288
        %v1093 = vperm.slane %v701, %v1092
        %vm1094 = vcmask 130112
        %v1095 = vsel %vm1094, %v1093, %v1091
        %v1096 = vadd.s32 %v609, 4294967280
        %v1097 = vperm.slane %v715, %v1096
        %vm1098 = vcmask 195712
        %v1099 = vsel %vm1098, %v1097, %v1095
        %v1100 = vadd.s32 %v609, 4294967272
        %v1101 = vperm.slane %v729, %v1100
        %vm1102 = vcmask 261312
        %v1103 = vsel %vm1102, %v1101, %v1099
        %v1104 = vadd.s32 %v609, 4294967264
        %v1105 = vperm.slane %v743, %v1104
        %vm1106 = vcmask 326912
        %v1107 = vsel %vm1106, %v1105, %v1103
        %v1108 = vadd.s32 %v609, 4294967256
        %v1109 = vperm.slane %v757, %v1108
        %vm1110 = vcmask 392512
        %v1111 = vsel %vm1110, %v1109, %v1107
        %v1112 = vadd.s32 %v609, 4294967248
        %v1113 = vperm.slane %v771, %v1112
        %vm1114 = vcmask 458112
        %v1115 = vsel %vm1114, %v1113, %v1111
        %v1116 = vadd.s32 %v609, 4294967240
        %v1117 = vperm.slane %v785, %v1116
        %vm1118 = vcmask 523712
        %v1119 = vsel %vm1118, %v1117, %v1115
        %v1120 = vadd.s32 %v609, 4294967232
        %v1121 = vperm.slane %v799, %v1120
        %vm1122 = vcmask 589312
        %v1123 = vsel %vm1122, %v1121, %v1119
        %v1124 = vadd.s32 %v609, 4294967224
        %v1125 = vperm.slane %v813, %v1124
        %vm1126 = vcmask 654912
        %v1127 = vsel %vm1126, %v1125, %v1123
        %v1128 = vadd.s32 %v609, 4294967216
        %v1129 = vperm.slane %v827, %v1128
        %vm1130 = vcmask 720512
        %v1131 = vsel %vm1130, %v1129, %v1127
        %v1132 = vadd.s32 %v609, 4294967208
        %v1133 = vperm.slane %v841, %v1132
        %vm1134 = vcmask 786112
        %v1135 = vsel %vm1134, %v1133, %v1131
        %v1136 = vadd.s32 %v609, 4294967200
        %v1137 = vperm.slane %v855, %v1136
        %vm1138 = vcmask 851712
        %v1139 = vsel %vm1138, %v1137, %v1135
        %v1140 = vadd.s32 %v609, 4294967192
        %v1141 = vperm.slane %v869, %v1140
        %vm1142 = vcmask 917312
        %v1143 = vsel %vm1142, %v1141, %v1139
        %v1144 = vadd.s32 %v609, 4294967184
        %v1145 = vperm.slane %v883, %v1144
        %vm1146 = vcmask 982912
        %v1147 = vsel %vm1146, %v1145, %v1143
        %v1148 = vadd.s32 %v609, 4294967176
        %v1149 = vperm.slane %v897, %v1148
        %vm1150 = vcmask 1048512
        %v1151 = vsel %vm1150, %v1149, %v1147
        %s1152 = scalar_lea.vmem [#allocation3], %s24
        %1153 = vst [vmem:[%s1152] sm:$0x1] %v1151
        %v1154 = vmul.f32 %v1011, %v1011
        %v1155 = vmul.f32 %v1012, %v1012
        %v1156 = vmul.f32 %v1013, %v1013
        %v1157 = vmul.f32 %v1014, %v1014
        %v1158 = vmul.f32 %v1015, %v1015
        %v1159 = vmul.f32 %v1016, %v1016
        %v1160 = vmul.f32 %v1017, %v1017
        %v1161 = vmul.f32 %v1018, %v1018
        %v1162 = vmul.f32 %v1019, %v1019
        %v1163 = vmul.f32 %v1020, %v1020
        %v1164 = vmul.f32 %v1021, %v1021
        %v1165 = vmul.f32 %v1022, %v1022
        %v1166 = vmul.f32 %v1023, %v1023
        %v1167 = vmul.f32 %v1024, %v1024
        %v1168 = vmul.f32 %v1025, %v1025
        %v1169 = vmul.f32 %v1026, %v1026
        %v1170 = vlaneseq
        %v1171 = vshrl.u32 %v1170, 7
        %v1172 = vadd.s32 %v1171, 8
        %v1173 = vadd.s32 %v1171, 16
        %v1174 = vadd.s32 %v1171, 24
        %v1175 = vadd.s32 %v1171, 32
        %v1176 = vadd.s32 %v1171, 40
        %v1177 = vadd.s32 %v1171, 48
        %v1178 = vadd.s32 %v1171, 56
        %v1179 = vadd.s32 %v1171, 64
        %v1180 = vadd.s32 %v1171, 72
        %v1181 = vadd.s32 %v1171, 80
        %v1182 = vadd.s32 %v1171, 88
        %v1183 = vadd.s32 %v1171, 96
        %v1184 = vadd.s32 %v1171, 104
        %v1185 = vadd.s32 %v1171, 112
        %v1186 = vadd.s32 %v1171, 120
        %s1187 = smul.u32 %s23, 128
        %v1188 = vstv %s1187
        %v1189 = vadd.s32 %v1171, %v1188
        %v1190 = vadd.s32 %v1172, %v1188
        %v1191 = vadd.s32 %v1173, %v1188
        %v1192 = vadd.s32 %v1174, %v1188
        %v1193 = vadd.s32 %v1175, %v1188
        %v1194 = vadd.s32 %v1176, %v1188
        %v1195 = vadd.s32 %v1177, %v1188
        %v1196 = vadd.s32 %v1178, %v1188
        %v1197 = vadd.s32 %v1179, %v1188
        %v1198 = vadd.s32 %v1180, %v1188
        %v1199 = vadd.s32 %v1181, %v1188
        %v1200 = vadd.s32 %v1182, %v1188
        %v1201 = vadd.s32 %v1183, %v1188
        %v1202 = vadd.s32 %v1184, %v1188
        %v1203 = vadd.s32 %v1185, %v1188
        %v1204 = vadd.s32 %v1186, %v1188
        %vm1205 = vcmp.lt.s32.totalorder %v1189, 32
        %vm1206 = vcmp.lt.s32.totalorder %v1190, 32
        %vm1207 = vcmp.lt.s32.totalorder %v1191, 32
        %vm1208 = vcmp.lt.s32.totalorder %v1192, 32
        %vm1209 = vcmp.lt.s32.totalorder %v1193, 32
        %vm1210 = vcmp.lt.s32.totalorder %v1194, 32
        %vm1211 = vcmp.lt.s32.totalorder %v1195, 32
        %vm1212 = vcmp.lt.s32.totalorder %v1196, 32
        %vm1213 = vcmp.lt.s32.totalorder %v1197, 32
        %vm1214 = vcmp.lt.s32.totalorder %v1198, 32
        %vm1215 = vcmp.lt.s32.totalorder %v1199, 32
        %vm1216 = vcmp.lt.s32.totalorder %v1200, 32
        %vm1217 = vcmp.lt.s32.totalorder %v1201, 32
        %vm1218 = vcmp.lt.s32.totalorder %v1202, 32
        %vm1219 = vcmp.lt.s32.totalorder %v1203, 32
        %vm1220 = vcmp.lt.s32.totalorder %v1204, 32
        %v1221 = vsel %vm1205, 1, 0
        %v1222 = vsel %vm1206, 1, 0
        %v1223 = vsel %vm1207, 1, 0
        %v1224 = vsel %vm1208, 1, 0
        %v1225 = vsel %vm1209, 1, 0
        %v1226 = vsel %vm1210, 1, 0
        %v1227 = vsel %vm1211, 1, 0
        %v1228 = vsel %vm1212, 1, 0
        %v1229 = vsel %vm1213, 1, 0
        %v1230 = vsel %vm1214, 1, 0
        %v1231 = vsel %vm1215, 1, 0
        %v1232 = vsel %vm1216, 1, 0
        %v1233 = vsel %vm1217, 1, 0
        %v1234 = vsel %vm1218, 1, 0
        %v1235 = vsel %vm1219, 1, 0
        %v1236 = vsel %vm1220, 1, 0
        %v1237 = vcvt.s32.f32 %v1221
        %v1238 = vcvt.s32.f32 %v1222
        %v1239 = vcvt.s32.f32 %v1223
        %v1240 = vcvt.s32.f32 %v1224
        %v1241 = vcvt.s32.f32 %v1225
        %v1242 = vcvt.s32.f32 %v1226
        %v1243 = vcvt.s32.f32 %v1227
        %v1244 = vcvt.s32.f32 %v1228
        %v1245 = vcvt.s32.f32 %v1229
        %v1246 = vcvt.s32.f32 %v1230
        %v1247 = vcvt.s32.f32 %v1231
        %v1248 = vcvt.s32.f32 %v1232
        %v1249 = vcvt.s32.f32 %v1233
        %v1250 = vcvt.s32.f32 %v1234
        %v1251 = vcvt.s32.f32 %v1235
        %v1252 = vcvt.s32.f32 %v1236
        %v1253 = vmul.f32 %v1154, %v1237
        %v1254 = vmul.f32 %v1155, %v1238
        %v1255 = vmul.f32 %v1156, %v1239
        %v1256 = vmul.f32 %v1157, %v1240
        %v1257 = vmul.f32 %v1158, %v1241
        %v1258 = vmul.f32 %v1159, %v1242
        %v1259 = vmul.f32 %v1160, %v1243
        %v1260 = vmul.f32 %v1161, %v1244
        %v1261 = vmul.f32 %v1162, %v1245
        %v1262 = vmul.f32 %v1163, %v1246
        %v1263 = vmul.f32 %v1164, %v1247
        %v1264 = vmul.f32 %v1165, %v1248
        %v1265 = vmul.f32 %v1166, %v1249
        %v1266 = vmul.f32 %v1167, %v1250
        %v1267 = vmul.f32 %v1168, %v1251
        %v1268 = vmul.f32 %v1169, %v1252
        %v1269 = vmul.f32 %v930, %v1237
        %v1270 = vmul.f32 %v931, %v1238
        %v1271 = vmul.f32 %v932, %v1239
        %v1272 = vmul.f32 %v933, %v1240
        %v1273 = vmul.f32 %v934, %v1241
        %v1274 = vmul.f32 %v935, %v1242
        %v1275 = vmul.f32 %v936, %v1243
        %v1276 = vmul.f32 %v937, %v1244
        %v1277 = vmul.f32 %v938, %v1245
        %v1278 = vmul.f32 %v939, %v1246
        %v1279 = vmul.f32 %v940, %v1247
        %v1280 = vmul.f32 %v941, %v1248
        %v1281 = vmul.f32 %v942, %v1249
        %v1282 = vmul.f32 %v943, %v1250
        %v1283 = vmul.f32 %v944, %v1251
        %v1284 = vmul.f32 %v945, %v1252
        %v1285 = vadd.f32 %v1269, %v1270
        %v1286 = vadd.f32 %v1285, %v1271
        %v1287 = vadd.f32 %v1286, %v1272
        %v1288 = vadd.f32 %v1287, %v1273
        %v1289 = vadd.f32 %v1288, %v1274
        %v1290 = vadd.f32 %v1289, %v1275
        %v1291 = vadd.f32 %v1290, %v1276
        %v1292 = vadd.f32 %v1291, %v1277
        %v1293 = vadd.f32 %v1292, %v1278
        %v1294 = vadd.f32 %v1293, %v1279
        %v1295 = vadd.f32 %v1294, %v1280
        %v1296 = vadd.f32 %v1295, %v1281
        %v1297 = vadd.f32 %v1296, %v1282
        %v1298 = vadd.f32 %v1297, %v1283
        %v1299 = vadd.f32 %v1298, %v1284
        %v1300 = vrot.slane %v1299, 4
        %v1301 = vadd.f32 %v1299, %v1300
        %v1302 = vrot.slane %v1301, 2
        %v1303 = vadd.f32 %v1301, %v1302
        %v1304 = vrot.slane %v1303, 1
        %v1305 = vadd.f32 %v1303, %v1304
        %s1306 = scalar_lea.vmem %s320, %s24
        %1307 = vst [vmem:[%s1306] sm:$0x1] %v1305
        %v1308 = vsel %vm410, %v1253, 0.0
        %1309 = vadd.xlane.f32.xlu0 %v1308
        %v1310 = vpop.xlane.xlu0 %1309
        %v1311 = vsel %vm410, %v1254, 0.0
        %1312 = vadd.xlane.f32.xlu0 %v1311
        %v1313 = vpop.xlane.xlu0 %1312
        %v1314 = vsel %vm410, %v1255, 0.0
        %1315 = vadd.xlane.f32.xlu0 %v1314
        %v1316 = vpop.xlane.xlu0 %1315
        %v1317 = vsel %vm410, %v1256, 0.0
        %1318 = vadd.xlane.f32.xlu0 %v1317
        %v1319 = vpop.xlane.xlu0 %1318
        %v1320 = vsel %vm410, %v1257, 0.0
        %1321 = vadd.xlane.f32.xlu0 %v1320
        %v1322 = vpop.xlane.xlu0 %1321
        %v1323 = vsel %vm410, %v1258, 0.0
        %1324 = vadd.xlane.f32.xlu0 %v1323
        %v1325 = vpop.xlane.xlu0 %1324
        %v1326 = vsel %vm410, %v1259, 0.0
        %1327 = vadd.xlane.f32.xlu0 %v1326
        %v1328 = vpop.xlane.xlu0 %1327
        %v1329 = vsel %vm410, %v1260, 0.0
        %1330 = vadd.xlane.f32.xlu0 %v1329
        %v1331 = vpop.xlane.xlu0 %1330
        %v1332 = vsel %vm410, %v1261, 0.0
        %1333 = vadd.xlane.f32.xlu0 %v1332
        %v1334 = vpop.xlane.xlu0 %1333
        %v1335 = vsel %vm410, %v1262, 0.0
        %1336 = vadd.xlane.f32.xlu0 %v1335
        %v1337 = vpop.xlane.xlu0 %1336
        %v1338 = vsel %vm410, %v1263, 0.0
        %1339 = vadd.xlane.f32.xlu0 %v1338
        %v1340 = vpop.xlane.xlu0 %1339
        %v1341 = vsel %vm410, %v1264, 0.0
        %1342 = vadd.xlane.f32.xlu0 %v1341
        %v1343 = vpop.xlane.xlu0 %1342
        %v1344 = vsel %vm410, %v1265, 0.0
        %1345 = vadd.xlane.f32.xlu0 %v1344
        %v1346 = vpop.xlane.xlu0 %1345
        %v1347 = vsel %vm410, %v1266, 0.0
        %1348 = vadd.xlane.f32.xlu0 %v1347
        %v1349 = vpop.xlane.xlu0 %1348
        %v1350 = vsel %vm410, %v1267, 0.0
        %1351 = vadd.xlane.f32.xlu0 %v1350
        %v1352 = vpop.xlane.xlu0 %1351
        %v1353 = vsel %vm410, %v1268, 0.0
        %1354 = vadd.xlane.f32.xlu0 %v1353
        %v1355 = vpop.xlane.xlu0 %1354
        %v1356 = vadd.f32 %v1310, %v1313
        %v1357 = vadd.f32 %v1356, %v1316
        %v1358 = vadd.f32 %v1357, %v1319
        %v1359 = vadd.f32 %v1358, %v1322
        %v1360 = vadd.f32 %v1359, %v1325
        %v1361 = vadd.f32 %v1360, %v1328
        %v1362 = vadd.f32 %v1361, %v1331
        %v1363 = vadd.f32 %v1362, %v1334
        %v1364 = vadd.f32 %v1363, %v1337
        %v1365 = vadd.f32 %v1364, %v1340
        %v1366 = vadd.f32 %v1365, %v1343
        %v1367 = vadd.f32 %v1366, %v1346
        %v1368 = vadd.f32 %v1367, %v1349
        %v1369 = vadd.f32 %v1368, %v1352
        %v1370 = vadd.f32 %v1369, %v1355
        %v1371 = vrot.slane %v1370, 4
        %v1372 = vadd.f32 %v1370, %v1371
        %v1373 = vrot.slane %v1372, 2
        %v1374 = vadd.f32 %v1372, %v1373
        %v1375 = vrot.slane %v1374, 1
        %v1376 = vadd.f32 %v1374, %v1375
        %s1377 = scalar_lea.vmem %s324, %s24
        %1378 = vst [vmem:[%s1377] sm:$0x1] %v1376
        %s1379 = smul.u32 16, %s23
        %p1380 = scmp.lt.s32.totalorder %s1379, 15
        %s1381 = scalar_select %p1380, %s1379, 15
        %s1382 = smul.addr %s1381, 8
        %s1383 = scalar_lea.vmem %s3, %s1382
        %p1384 = scmp.lt.s32.totalorder %s23, 0
        %s1385 = scalar_select %p1384, %s23, 0
        %s1386 = smul.addr %s1385, 4
        %s1387 = scalar_lea.vmem %s5, %s1386
        %p1388 = scmp.lt.s32.totalorder %s23, 0
        %s1389 = scalar_select %p1388, %s23, 0
        %s1390 = smul.addr %s1389, 4
        %s1391 = scalar_lea.vmem %s6, %s1390
        // Predicated region
        $region37: #{tpu_custom_call.1} parent=31 // pred_check
          %p1392 = pneg %p127
        $region38: #{tpu_custom_call.1} parent=31 // pred_check_branch
          %1394 = sbr.rel (%p1392) target = $region40
        $region39: #{tpu_custom_call.1} parent=31 // pred_region
          %s1395 = smul.u32 16, %s23
        $region40: #{tpu_custom_call.1} parent=31 // pred_fallthru
          _
        // Predicated region
        $region41: #{tpu_custom_call.1} parent=31 // pred_check
          %p1396 = pneg %p153
        $region42: #{tpu_custom_call.1} parent=31 // pred_check_branch
          %1398 = sbr.rel (%p1396) target = $region44
        $region43: #{tpu_custom_call.1} parent=31 // pred_region
          %1400 = vsyncadd [#allocation4], 0
          %s1401 = smul.addr %s23, 4
          %s1402 = scalar_lea.hbm %s4, %s1401
          %s1404 = sshll.u32 [#allocation3], 4
          %s1405 = int_to_ptr.vmem [resolvable:$true] %s1404
          %s1406 = sshll.u32 %s1402, 4
          %s1407 = int_to_ptr.hbm [resolvable:$true] %s1406
          %1409 = dma.vmem_to_hbm [thread:$0]  %s1405, 64, %s1407, [#allocation4]
        $region44: #{tpu_custom_call.1} parent=31 // pred_fallthru
          _
        // Predicated region
        $region45: #{tpu_custom_call.1} parent=31 // pred_check
          %p1410 = pneg %p179
        $region46: #{tpu_custom_call.1} parent=31 // pred_check_branch
          %1412 = sbr.rel (%p1410) target = $region48
        $region47: #{tpu_custom_call.1} parent=31 // pred_region
          _
        $region48: #{tpu_custom_call.1} parent=31 // pred_fallthru
          _
        // Predicated region
        $region49: #{tpu_custom_call.1} parent=31 // pred_check
          %p1413 = pneg %p205
        $region50: #{tpu_custom_call.1} parent=31 // pred_check_branch
          %1415 = sbr.rel (%p1413) target = $region52
        $region51: #{tpu_custom_call.1} parent=31 // pred_region
          _
        $region52: #{tpu_custom_call.1} parent=31 // pred_fallthru
          _
        // Predicated region
        $region53: #{tpu_custom_call.1} parent=31 // pred_check
          %p1416 = pneg %p127
        $region54: #{tpu_custom_call.1} parent=31 // pred_check_branch
          %1418 = sbr.rel (%p1416) target = $region56
        $region55: #{tpu_custom_call.1} parent=31 // pred_region
          %s1419 = smul.u32 16, %s23
          %p1420 = scmp.lt.s32.totalorder %s1419, 15
          %s1421 = scalar_select %p1420, %s1419, 15
          %s1422 = smul.addr %s1421, 8
          %s1423 = scalar_lea.vmem %s3, %s1422
        $region56: #{tpu_custom_call.1} parent=31 // pred_fallthru
          _
        // Predicated region
        $region57: #{tpu_custom_call.1} parent=31 // pred_check
          %p1424 = pneg %p153
        $region58: #{tpu_custom_call.1} parent=31 // pred_check_branch
          %1426 = sbr.rel (%p1424) target = $region60
        $region59: #{tpu_custom_call.1} parent=31 // pred_region
          %1428 = dma.done [#allocation4], 64
        $region60: #{tpu_custom_call.1} parent=31 // pred_fallthru
          _
        // Predicated region
        $region61: #{tpu_custom_call.1} parent=31 // pred_check
          %p1429 = pneg %p179
        $region62: #{tpu_custom_call.1} parent=31 // pred_check_branch
          %1431 = sbr.rel (%p1429) target = $region64
        $region63: #{tpu_custom_call.1} parent=31 // pred_region
          %p1432 = scmp.lt.s32.totalorder %s23, 0
          %s1433 = scalar_select %p1432, %s23, 0
          %s1434 = smul.addr %s1433, 4
          %s1435 = scalar_lea.vmem %s5, %s1434
        $region64: #{tpu_custom_call.1} parent=31 // pred_fallthru
          _
        // Predicated region
        $region65: #{tpu_custom_call.1} parent=31 // pred_check
          %p1436 = pneg %p205
        $region66: #{tpu_custom_call.1} parent=31 // pred_check_branch
          %1438 = sbr.rel (%p1436) target = $region68
        $region67: #{tpu_custom_call.1} parent=31 // pred_region
          %p1439 = scmp.lt.s32.totalorder %s23, 0
          %s1440 = scalar_select %p1439, %s23, 0
          %s1441 = smul.addr %s1440, 4
          %s1442 = scalar_lea.vmem %s6, %s1441
        $region68: #{tpu_custom_call.1} parent=31 // pred_fallthru
          _
      $region32: #{tpu_custom_call.1} parent=5 // pred_fallthru
        _
      %p1443 = scmp.le.s32.totalorder 2, %s14
      // Predicated region
      $region69: #{tpu_custom_call.1} parent=5 // pred_check
        %p1444 = pneg %p1443
      $region70: #{tpu_custom_call.1} parent=5 // pred_check_branch
        %1446 = sbr.rel (%p1444) target = $region72
      $region71: #{tpu_custom_call.1} parent=5 // pred_region
        %s1447 = ssub.s32 %s14, 2
      $region72: #{tpu_custom_call.1} parent=5 // pred_fallthru
        _
    $region6: #{tpu_custom_call.1} parent=1 // loop_footer
      %s18 = sadd.s32 1, %s14
    $region7: #{tpu_custom_call.1} parent=1 // loop_footer_branch
      %13 = sbr.rel target = $region3
    $region8: #{tpu_custom_call.1} parent=1 // loop_exit
      _
    %1448 = vsyncpa [#allocation4], 1
    %s1449 = scalar_lea.sflag [#allocation4], 1
    %1450 = vsyncpa %s1449, 1

</llo_original>
